<compile_context>
chip_gen: v6e
topology: v6e:2x2x1
jax: 0.10.0
libtpu: 0.0.40
codegen_flags: <defaults>
</compile_context>

<pallas_src>
import functools

import jax
import jax.numpy as jnp
from jax.experimental import pallas as pl
from jax.experimental.pallas import tpu as pltpu

LANE = 128      # lane (last-dim) padding multiple
SUBLANE = 16    # sublane padding multiple (bf16 packs 16 rows per vreg)

# TODO(synk): for many tiny graphs, batch them (block-diagonal H or a leading
# grid axis over graphs) into one pallas_call; at N=64 the forward is
# dispatch-overhead bound, not compute bound.
# TODO(synk): on v7x, optionally store the 0/1 incidence in fp8 (exact) to
# halve incidence VMEM again — only after checking the lowered MLIR keeps a
# single MXU op for the fp8 x bf16 product.


# ---------------------------------------------------------------------------
# Small helpers
# ---------------------------------------------------------------------------
def _round_up(v, m):
    return ((v + m - 1) // m) * m


def _pad2(a, rows, cols):
    r, c = a.shape
    return jnp.pad(a, ((0, rows - r), (0, cols - c)))


def _vmem_limit_bytes(*arrays, extra=0):
    total = sum(int(a.size) * a.dtype.itemsize for a in arrays) + extra
    return int(min(100 * 2**20, max(32 * 2**20, 4 * total)))


# ---------------------------------------------------------------------------
# Kernel 1: fully fused forward (small graphs, everything VMEM-resident)
# ---------------------------------------------------------------------------
def _fused_kernel(num_layers, *refs):
    """refs layout (all padded, full-array VMEM blocks):
      x [Np,F0p] bf16, h [Np,Mp] bf16 (exact 0/1), dinv [Np,1] f32, binv [Mp,1] f32,
      per layer: w [Fin,Fout] bf16 (BN-folded), shift [1,Fout] f32,
      classifier: w1, b1, w2, b2,   out [Np,Cp] f32.
    """
    x_ref, h_ref, dinv_ref, binv_ref = refs[:4]
    layer_refs = refs[4:4 + 2 * num_layers]
    w1_ref, b1_ref, w2_ref, b2_ref, o_ref = refs[4 + 2 * num_layers:]

    hmat = h_ref[...]           # [Np, Mp] bf16 (0/1, exact)
    dinv = dinv_ref[...]        # [Np, 1]  f32
    binv = binv_ref[...]        # [Mp, 1]  f32
    act = x_ref[...]            # [Np, F]  bf16

    for i in range(num_layers):
        w = layer_refs[2 * i][...]            # [Fin, Fout] bf16 (BN scale folded in)
        shift = layer_refs[2 * i + 1][...]    # [1, Fout]   f32  (bias + BN shift folded)
        # a = H^T @ act : contract the node dim of the single incidence copy
        # (even if Mosaic inserts an XLU transpose here it is cheaper than
        #  holding a second, transposed incidence copy resident in VMEM).
        a = jax.lax.dot_general(hmat, act, (((0,), (0,)), ((), ())),
                                preferred_element_type=jnp.float32)      # [Mp, Fin]
        e = jnp.dot((a * binv).astype(jnp.bfloat16), w,
                    preferred_element_type=jnp.float32)                  # [Mp, Fout]
        y = jnp.dot(hmat, e.astype(jnp.bfloat16),
                    preferred_element_type=jnp.float32)                  # [Np, Fout]
        act = jnp.maximum(y * dinv + shift, 0.0).astype(jnp.bfloat16)

    # classifier: Linear -> ReLU -> (Dropout == identity in eval) -> Linear
    # TODO(synk): training-mode stochastic dropout intentionally omitted (eval semantics).
    hcls = jnp.dot(act, w1_ref[...], preferred_element_type=jnp.float32)
    hcls = jnp.maximum(hcls + b1_ref[...], 0.0).astype(jnp.bfloat16)
    o_ref[...] = jnp.dot(hcls, w2_ref[...],
                         preferred_element_type=jnp.float32) + b2_ref[...]


# ---------------------------------------------------------------------------
# Kernels 2-4: node-row-tiled two-phase path (large graphs)
# ---------------------------------------------------------------------------
def _phase_a_kernel(x_ref, h_ref, binv_ref, w_ref, e_ref, acc_ref):
    """Accumulate E = (B^{-1} H^T X) W over node-row tiles (grid axis 'arbitrary')."""
    i = pl.program_id(0)

    @pl.when(i == 0)
    def _():
        acc_ref[...] = jnp.zeros_like(acc_ref)

    # acc += H_tile^T @ X_tile   (contract the node-tile dim)
    acc_ref[...] += jax.lax.dot_general(
        h_ref[...], x_ref[...], (((0,), (0,)), ((), ())),
        preferred_element_type=jnp.float32)

    @pl.when(i == pl.num_programs(0) - 1)
    def _():
        e_ref[...] = jnp.dot(
            (acc_ref[...] * binv_ref[...]).astype(jnp.bfloat16), w_ref[...],
            preferred_element_type=jnp.float32).astype(e_ref.dtype)


def _phase_b_kernel(h_ref, e_ref, dinv_ref, shift_ref, y_ref):
    """Y_tile = relu(D^{-1} H_tile E + shift)  (grid axis 'parallel')."""
    y = jnp.dot(h_ref[...], e_ref[...], preferred_element_type=jnp.float32)
    y_ref[...] = jnp.maximum(y * dinv_ref[...] + shift_ref[...], 0.0).astype(y_ref.dtype)


def _phase_b_cls_kernel(h_ref, e_ref, dinv_ref, shift_ref,
                        w1_ref, b1_ref, w2_ref, b2_ref, o_ref):
    """Last layer's Phase B with the 2-layer classifier fused in."""
    y = jnp.dot(h_ref[...], e_ref[...], preferred_element_type=jnp.float32)
    act = jnp.maximum(y * dinv_ref[...] + shift_ref[...], 0.0).astype(jnp.bfloat16)
    hcls = jnp.dot(act, w1_ref[...], preferred_element_type=jnp.float32)
    hcls = jnp.maximum(hcls + b1_ref[...], 0.0).astype(jnp.bfloat16)
    o_ref[...] = jnp.dot(hcls, w2_ref[...],
                         preferred_element_type=jnp.float32) + b2_ref[...]


# ---------------------------------------------------------------------------
# One-time preprocessing (cache these across forward calls!)
# ---------------------------------------------------------------------------
def preprocess_graph(hinc, node_tile="auto"):
    """Pad/cast the incidence matrix and precompute f32 degree normalizations.

    node_tile=None  -> fully VMEM-resident fused path.
    node_tile=int   -> two-phase node-row-tiled path with that tile size.
    node_tile="auto"-> pick based on the resident incidence footprint.
    """
    n, m = hinc.shape
    m_p = _round_up(m, LANE)
    if node_tile == "auto":
        resident_bytes = 2 * _round_up(n, SUBLANE) * m_p     # bf16 incidence
        node_tile = None if resident_bytes < 24 * 2**20 else 512
    if node_tile is None:
        n_p = _round_up(n, SUBLANE)
    else:
        assert node_tile % SUBLANE == 0
        n_p = _round_up(n, node_tile)

    node_deg = jnp.sum(hinc, axis=1, keepdims=True)                    # [N, 1]
    edge_deg = jnp.sum(hinc, axis=0, keepdims=True).T                  # [M, 1]
    dinv = jnp.where(node_deg > 0, 1.0 / jnp.maximum(node_deg, 1.0), 0.0)
    binv = jnp.where(edge_deg > 0, 1.0 / jnp.maximum(edge_deg, 1.0), 0.0)

    return dict(
        h=_pad2(hinc, n_p, m_p).astype(jnp.bfloat16),                  # exact 0/1 in bf16
        dinv=_pad2(dinv, n_p, 1).astype(jnp.float32),
        binv=_pad2(binv, m_p, 1).astype(jnp.float32),
        n=n, m=m, n_p=n_p, m_p=m_p, node_tile=node_tile,
    )


def fold_params(params, eps=1e-5):
    """Fold BatchNorm (eval) + conv bias into weights/shifts, pad, cast to bf16."""
    layers = []
    for layer in params["layers"]:
        fin, fout = layer["w"].shape
        scale = layer["bn_gamma"] / jnp.sqrt(layer["bn_var"] + eps)              # [1, fout]
        shift = (layer["bias"] - layer["bn_mean"]) * scale + layer["bn_beta"]    # [1, fout]
        w_folded = layer["w"] * scale
        layers.append((
            _pad2(w_folded, _round_up(fin, LANE), _round_up(fout, LANE)).astype(jnp.bfloat16),
            _pad2(shift, 1, _round_up(fout, LANE)).astype(jnp.float32),
        ))
    hdim, h2 = params["cls_w1"].shape
    ncls = params["cls_w2"].shape[1]
    return dict(
        layers=layers,
        w1=_pad2(params["cls_w1"], _round_up(hdim, LANE), _round_up(h2, LANE)).astype(jnp.bfloat16),
        b1=_pad2(params["cls_b1"], 1, _round_up(h2, LANE)).astype(jnp.float32),
        w2=_pad2(params["cls_w2"], _round_up(h2, LANE), _round_up(ncls, LANE)).astype(jnp.bfloat16),
        b2=_pad2(params["cls_b2"], 1, _round_up(ncls, LANE)).astype(jnp.float32),
        num_classes=ncls,
    )


# ---------------------------------------------------------------------------
# Forward paths
# ---------------------------------------------------------------------------
def _forward_fused(x_p, graph, folded):
    n_p, m_p = graph["n_p"], graph["m_p"]
    c_p = folded["w2"].shape[1]
    num_layers = len(folded["layers"])

    args = [x_p, graph["h"], graph["dinv"], graph["binv"]]
    for w, shift in folded["layers"]:
        args += [w, shift]
    args += [folded["w1"], folded["b1"], folded["w2"], folded["b2"]]

    flops = 0
    for w, _ in folded["layers"]:
        fin_p, fout_p = w.shape
        flops += 2 * n_p * m_p * fin_p + 2 * m_p * fin_p * fout_p + 2 * n_p * m_p * fout_p
    hid_p, h2_p = folded["w1"].shape
    flops += 2 * n_p * hid_p * h2_p + 2 * n_p * h2_p * c_p
    bytes_accessed = sum(int(a.size) * a.dtype.itemsize for a in args) + n_p * c_p * 4

    return pl.pallas_call(
        functools.partial(_fused_kernel, num_layers),
        out_shape=jax.ShapeDtypeStruct((n_p, c_p), jnp.float32),
        in_specs=[pl.BlockSpec(memory_space=pltpu.MemorySpace.VMEM)] * len(args),
        out_specs=pl.BlockSpec(memory_space=pltpu.MemorySpace.VMEM),
        compiler_params=pltpu.CompilerParams(
            vmem_limit_bytes=_vmem_limit_bytes(*args, extra=n_p * c_p * 4)),
        cost_estimate=pl.CostEstimate(flops=int(flops), transcendentals=0,
                                      bytes_accessed=int(bytes_accessed)),
    )(*args)


def _forward_tiled(x_p, graph, folded):
    """Per-layer two-phase node-row-tiled path for graphs that exceed VMEM."""
    h, dinv, binv = graph["h"], graph["dinv"], graph["binv"]
    n_p, m_p, tn = graph["n_p"], graph["m_p"], graph["node_tile"]
    n_tiles = n_p // tn
    num_layers = len(folded["layers"])
    c_p = folded["w2"].shape[1]
    vmem_limit = _vmem_limit_bytes(h, dinv, binv, x_p,
                                   *[a for pair in folded["layers"] for a in pair],
                                   folded["w1"], folded["b1"], folded["w2"], folded["b2"])

    act = x_p
    out = None
    for li, (w, shift) in enumerate(folded["layers"]):
        fin_p, fout_p = w.shape

        # Phase A: E = (B^{-1} H^T act) W, accumulated over node-row tiles.
        # v6e/v7x note: at the default tile (512 rows) the contraction depth per
        # MXU issue is >= 256, keeping the 256-wide MXU fully fed.
        e = pl.pallas_call(
            _phase_a_kernel,
            out_shape=jax.ShapeDtypeStruct((m_p, fout_p), jnp.bfloat16),
            grid=(n_tiles,),
            in_specs=[
                pl.BlockSpec((tn, fin_p), lambda i: (i, 0)),     # X row tile
                pl.BlockSpec((tn, m_p), lambda i: (i, 0)),       # H row tile
                pl.BlockSpec((m_p, 1), lambda i: (0, 0)),        # binv (full)
                pl.BlockSpec((fin_p, fout_p), lambda i: (0, 0)), # W (full)
            ],
            out_specs=pl.BlockSpec((m_p, fout_p), lambda i: (0, 0)),
            scratch_shapes=[pltpu.VMEM((m_p, fin_p), jnp.float32)],
            compiler_params=pltpu.CompilerParams(
                dimension_semantics=("arbitrary",),
                vmem_limit_bytes=vmem_limit),
        )(act, h, binv, w)

        if li < num_layers - 1:
            # Phase B: Y = relu(D^{-1} H E + shift), node tiles independent -> parallel.
            act = pl.pallas_call(
                _phase_b_kernel,
                out_shape=jax.ShapeDtypeStruct((n_p, fout_p), jnp.bfloat16),
                grid=(n_tiles,),
                in_specs=[
                    pl.BlockSpec((tn, m_p), lambda i: (i, 0)),       # H row tile
                    pl.BlockSpec((m_p, fout_p), lambda i: (0, 0)),   # E (full)
                    pl.BlockSpec((tn, 1), lambda i: (i, 0)),         # dinv row tile
                    pl.BlockSpec((1, fout_p), lambda i: (0, 0)),     # shift
                ],
                out_specs=pl.BlockSpec((tn, fout_p), lambda i: (i, 0)),
                compiler_params=pltpu.CompilerParams(
                    dimension_semantics=("parallel",),
                    vmem_limit_bytes=vmem_limit),
            )(h, e, dinv, shift)
        else:
            # Last layer's Phase B with the classifier fused in.
            hid_p, h2_p = folded["w1"].shape
            out = pl.pallas_call(
                _phase_b_cls_kernel,
                out_shape=jax.ShapeDtypeStruct((n_p, c_p), jnp.float32),
                grid=(n_tiles,),
                in_specs=[
                    pl.BlockSpec((tn, m_p), lambda i: (i, 0)),
                    pl.BlockSpec((m_p, fout_p), lambda i: (0, 0)),
                    pl.BlockSpec((tn, 1), lambda i: (i, 0)),
                    pl.BlockSpec((1, fout_p), lambda i: (0, 0)),
                    pl.BlockSpec((hid_p, h2_p), lambda i: (0, 0)),
                    pl.BlockSpec((1, h2_p), lambda i: (0, 0)),
                    pl.BlockSpec((h2_p, c_p), lambda i: (0, 0)),
                    pl.BlockSpec((1, c_p), lambda i: (0, 0)),
                ],
                out_specs=pl.BlockSpec((tn, c_p), lambda i: (i, 0)),
                compiler_params=pltpu.CompilerParams(
                    dimension_semantics=("parallel",),
                    vmem_limit_bytes=vmem_limit),
            )(h, e, dinv, shift, folded["w1"], folded["b1"], folded["w2"], folded["b2"])
    return out


def hypergnn_forward(x, graph, folded):
    """Full HyperGNN forward (eval mode). `graph` / `folded` come from the
    one-time preprocessing helpers above (cache them across calls)."""
    n, n_p = graph["n"], graph["n_p"]
    f_p = folded["layers"][0][0].shape[0]
    x_p = _pad2(x, n_p, f_p).astype(jnp.bfloat16)
    if graph["node_tile"] is None:
        out_p = _forward_fused(x_p, graph, folded)
    else:
        out_p = _forward_tiled(x_p, graph, folded)
    return out_p[:n, :folded["num_classes"]]


# ---------------------------------------------------------------------------
# Pure-JAX (f32) reference of the same eval-mode forward, for validation
# ---------------------------------------------------------------------------
def reference_forward(x, hinc, params, eps=1e-5):
    node_deg = jnp.sum(hinc, axis=1, keepdims=True)
    edge_deg = jnp.sum(hinc, axis=0, keepdims=True).T
    dinv = jnp.where(node_deg > 0, 1.0 / jnp.maximum(node_deg, 1.0), 0.0)
    binv = jnp.where(edge_deg > 0, 1.0 / jnp.maximum(edge_deg, 1.0), 0.0)
    h = x
    for layer in params["layers"]:
        e = binv * (hinc.T @ h)
        y = dinv * (hinc @ (e @ layer["w"])) + layer["bias"]
        y = (y - layer["bn_mean"]) / jnp.sqrt(layer["bn_var"] + eps) * layer["bn_gamma"] \
            + layer["bn_beta"]
        h = jnp.maximum(y, 0.0)
    h = jnp.maximum(h @ params["cls_w1"] + params["cls_b1"], 0.0)
    return h @ params["cls_w2"] + params["cls_b2"]


# ---------------------------------------------------------------------------
# Deterministic parameter construction (matches the PyTorch module layout)
# ---------------------------------------------------------------------------
def init_params(key, num_features, num_classes, hidden_dim=32, num_layers=3):
    dims = [num_features] + [hidden_dim] * num_layers
    layers = []
    for i in range(num_layers):
        key, k1, k2 = jax.random.split(key, 3)
        fin, fout = dims[i], dims[i + 1]
        layers.append(dict(
            w=jax.random.normal(k1, (fin, fout), jnp.float32) * 0.1,
            bias=jax.random.normal(k2, (1, fout), jnp.float32) * 0.01,
            bn_gamma=jnp.ones((1, fout), jnp.float32),
            bn_beta=jnp.zeros((1, fout), jnp.float32),
            bn_mean=jnp.zeros((1, fout), jnp.float32),
            bn_var=jnp.ones((1, fout), jnp.float32),
        ))
    key, k1, k2, k3, k4 = jax.random.split(key, 5)
    half = hidden_dim // 2
    return dict(
        layers=layers,
        cls_w1=jax.random.normal(k1, (hidden_dim, half), jnp.float32) * 0.1,
        cls_b1=jax.random.normal(k2, (1, half), jnp.float32) * 0.01,
        cls_w2=jax.random.normal(k3, (half, num_classes), jnp.float32) * 0.1,
        cls_b2=jax.random.normal(k4, (1, num_classes), jnp.float32) * 0.01,
    )


if __name__ == "__main__":
    N = 64              # nodes
    M = 16              # hyperedges
    NUM_FEATURES = 16
    HIDDEN = 32
    NUM_CLASSES = 4
    NUM_LAYERS = 3

    key = jax.random.PRNGKey(0)
    key, kx, kh = jax.random.split(key, 3)
    x = jax.random.normal(kx, (N, NUM_FEATURES), jnp.float32)
    # dense incidence matrix (equivalent to a deterministic hyperedge_index)
    hinc = jax.random.bernoulli(kh, p=0.25, shape=(N, M)).astype(jnp.float32)

    params = init_params(key, NUM_FEATURES, NUM_CLASSES,
                         hidden_dim=HIDDEN, num_layers=NUM_LAYERS)

    # One-time preprocessing (cached across forward calls).
    folded = fold_params(params)

    # Path 1: fully VMEM-resident fused kernel (what small graphs use).
    graph_fused = preprocess_graph(hinc, node_tile=None)
    out_fused = jax.block_until_ready(hypergnn_forward(x, graph_fused, folded))

    # Path 2: two-phase node-row-tiled pipeline (what large graphs use);
    # forced here with a tiny tile so both paths are exercised.
    graph_tiled = preprocess_graph(hinc, node_tile=32)
    out_tiled = jax.block_until_ready(hypergnn_forward(x, graph_tiled, folded))

    assert out_fused.shape == (N, NUM_CLASSES)
    assert out_tiled.shape == (N, NUM_CLASSES)
    assert bool(jnp.all(jnp.isfinite(out_fused)))
    assert bool(jnp.all(jnp.isfinite(out_tiled)))

    ref = reference_forward(x, hinc, params)
    tol = 3e-2 * (1.0 + float(jnp.max(jnp.abs(ref))))   # bf16 matmuls, f32 accumulation
    assert float(jnp.max(jnp.abs(out_fused - ref))) < tol
    assert float(jnp.max(jnp.abs(out_tiled - ref))) < tol

    print("KERNEL_OK")
</pallas_src>

<mosaic_0001>
module attributes {stable_mosaic.version = 11 : i64} {
  func.func @_fused_kernel(%arg0: memref<64x128xbf16, #tpu.memory_space<vmem>>, %arg1: memref<64x128xbf16, #tpu.memory_space<vmem>>, %arg2: memref<64x1xf32, #tpu.memory_space<vmem>>, %arg3: memref<128x1xf32, #tpu.memory_space<vmem>>, %arg4: memref<128x128xbf16, #tpu.memory_space<vmem>>, %arg5: memref<1x128xf32, #tpu.memory_space<vmem>>, %arg6: memref<128x128xbf16, #tpu.memory_space<vmem>>, %arg7: memref<1x128xf32, #tpu.memory_space<vmem>>, %arg8: memref<128x128xbf16, #tpu.memory_space<vmem>>, %arg9: memref<1x128xf32, #tpu.memory_space<vmem>>, %arg10: memref<128x128xbf16, #tpu.memory_space<vmem>>, %arg11: memref<1x128xf32, #tpu.memory_space<vmem>>, %arg12: memref<128x128xbf16, #tpu.memory_space<vmem>>, %arg13: memref<1x128xf32, #tpu.memory_space<vmem>>, %arg14: memref<64x128xf32, #tpu.memory_space<vmem>>) attributes {dimension_semantics = [], scalar_prefetch = 0 : i64, scratch_operands = 0 : i64, tpu.core_type = #tpu.core_type<tc>} {
    %c0 = arith.constant 0 : index
    %c0_0 = arith.constant 0 : index
    %0 = vector.load %arg1[%c0, %c0_0] : memref<64x128xbf16, #tpu.memory_space<vmem>>, vector<64x128xbf16>
    %c0_1 = arith.constant 0 : index
    %c0_2 = arith.constant 0 : index
    %1 = vector.load %arg2[%c0_1, %c0_2] : memref<64x1xf32, #tpu.memory_space<vmem>>, vector<64x1xf32>
    %c0_3 = arith.constant 0 : index
    %c0_4 = arith.constant 0 : index
    %2 = vector.load %arg3[%c0_3, %c0_4] : memref<128x1xf32, #tpu.memory_space<vmem>>, vector<128x1xf32>
    %c0_5 = arith.constant 0 : index
    %c0_6 = arith.constant 0 : index
    %3 = vector.load %arg0[%c0_5, %c0_6] : memref<64x128xbf16, #tpu.memory_space<vmem>>, vector<64x128xbf16>
    %c0_7 = arith.constant 0 : index
    %c0_8 = arith.constant 0 : index
    %4 = vector.load %arg4[%c0_7, %c0_8] : memref<128x128xbf16, #tpu.memory_space<vmem>>, vector<128x128xbf16>
    %c0_9 = arith.constant 0 : index
    %c0_10 = arith.constant 0 : index
    %5 = vector.load %arg5[%c0_9, %c0_10] : memref<1x128xf32, #tpu.memory_space<vmem>>, vector<1x128xf32>
    %cst = arith.constant dense<0.000000e+00> : vector<128x128xf32>
    %6 = tpu.matmul %0, %3, %cst {dimension_numbers = #tpu.dot_dimension_numbers<[0], [0], [1], [1], [0, 1, 1, 1], [], []>} : vector<64x128xbf16>, vector<64x128xbf16>, vector<128x128xf32> -> vector<128x128xf32>
    %7 = vector.broadcast %2 : vector<128x1xf32> to vector<128x128xf32>
    %8 = arith.mulf %6, %7 : vector<128x128xf32>
    %9 = arith.truncf %8 : vector<128x128xf32> to vector<128x128xbf16>
    %cst_11 = arith.constant dense<0.000000e+00> : vector<128x128xf32>
    %10 = tpu.matmul %9, %4, %cst_11 {dimension_numbers = #tpu.dot_dimension_numbers<[1], [0], [0], [1], [0, 0, 1, 1], [], []>} : vector<128x128xbf16>, vector<128x128xbf16>, vector<128x128xf32> -> vector<128x128xf32>
    %11 = arith.truncf %10 : vector<128x128xf32> to vector<128x128xbf16>
    %cst_12 = arith.constant dense<0.000000e+00> : vector<64x128xf32>
    %12 = tpu.matmul %0, %11, %cst_12 {dimension_numbers = #tpu.dot_dimension_numbers<[1], [0], [0], [1], [0, 0, 1, 1], [], []>} : vector<64x128xbf16>, vector<128x128xbf16>, vector<64x128xf32> -> vector<64x128xf32>
    %13 = vector.broadcast %1 : vector<64x1xf32> to vector<64x128xf32>
    %14 = arith.mulf %12, %13 : vector<64x128xf32>
    %15 = vector.broadcast %5 : vector<1x128xf32> to vector<64x128xf32>
    %16 = arith.addf %14, %15 : vector<64x128xf32>
    %cst_13 = arith.constant 0.000000e+00 : f32
    %17 = vector.broadcast %cst_13 : f32 to vector<64x128xf32>
    %18 = arith.maximumf %16, %17 : vector<64x128xf32>
    %19 = arith.truncf %18 : vector<64x128xf32> to vector<64x128xbf16>
    %c0_14 = arith.constant 0 : index
    %c0_15 = arith.constant 0 : index
    %20 = vector.load %arg6[%c0_14, %c0_15] : memref<128x128xbf16, #tpu.memory_space<vmem>>, vector<128x128xbf16>
    %c0_16 = arith.constant 0 : index
    %c0_17 = arith.constant 0 : index
    %21 = vector.load %arg7[%c0_16, %c0_17] : memref<1x128xf32, #tpu.memory_space<vmem>>, vector<1x128xf32>
    %cst_18 = arith.constant dense<0.000000e+00> : vector<128x128xf32>
    %22 = tpu.matmul %0, %19, %cst_18 {dimension_numbers = #tpu.dot_dimension_numbers<[0], [0], [1], [1], [0, 1, 1, 1], [], []>} : vector<64x128xbf16>, vector<64x128xbf16>, vector<128x128xf32> -> vector<128x128xf32>
    %23 = vector.broadcast %2 : vector<128x1xf32> to vector<128x128xf32>
    %24 = arith.mulf %22, %23 : vector<128x128xf32>
    %25 = arith.truncf %24 : vector<128x128xf32> to vector<128x128xbf16>
    %cst_19 = arith.constant dense<0.000000e+00> : vector<128x128xf32>
    %26 = tpu.matmul %25, %20, %cst_19 {dimension_numbers = #tpu.dot_dimension_numbers<[1], [0], [0], [1], [0, 0, 1, 1], [], []>} : vector<128x128xbf16>, vector<128x128xbf16>, vector<128x128xf32> -> vector<128x128xf32>
    %27 = arith.truncf %26 : vector<128x128xf32> to vector<128x128xbf16>
    %cst_20 = arith.constant dense<0.000000e+00> : vector<64x128xf32>
    %28 = tpu.matmul %0, %27, %cst_20 {dimension_numbers = #tpu.dot_dimension_numbers<[1], [0], [0], [1], [0, 0, 1, 1], [], []>} : vector<64x128xbf16>, vector<128x128xbf16>, vector<64x128xf32> -> vector<64x128xf32>
    %29 = vector.broadcast %1 : vector<64x1xf32> to vector<64x128xf32>
    %30 = arith.mulf %28, %29 : vector<64x128xf32>
    %31 = vector.broadcast %21 : vector<1x128xf32> to vector<64x128xf32>
    %32 = arith.addf %30, %31 : vector<64x128xf32>
    %cst_21 = arith.constant 0.000000e+00 : f32
    %33 = vector.broadcast %cst_21 : f32 to vector<64x128xf32>
    %34 = arith.maximumf %32, %33 : vector<64x128xf32>
    %35 = arith.truncf %34 : vector<64x128xf32> to vector<64x128xbf16>
    %c0_22 = arith.constant 0 : index
    %c0_23 = arith.constant 0 : index
    %36 = vector.load %arg8[%c0_22, %c0_23] : memref<128x128xbf16, #tpu.memory_space<vmem>>, vector<128x128xbf16>
    %c0_24 = arith.constant 0 : index
    %c0_25 = arith.constant 0 : index
    %37 = vector.load %arg9[%c0_24, %c0_25] : memref<1x128xf32, #tpu.memory_space<vmem>>, vector<1x128xf32>
    %cst_26 = arith.constant dense<0.000000e+00> : vector<128x128xf32>
    %38 = tpu.matmul %0, %35, %cst_26 {dimension_numbers = #tpu.dot_dimension_numbers<[0], [0], [1], [1], [0, 1, 1, 1], [], []>} : vector<64x128xbf16>, vector<64x128xbf16>, vector<128x128xf32> -> vector<128x128xf32>
    %39 = vector.broadcast %2 : vector<128x1xf32> to vector<128x128xf32>
    %40 = arith.mulf %38, %39 : vector<128x128xf32>
    %41 = arith.truncf %40 : vector<128x128xf32> to vector<128x128xbf16>
    %cst_27 = arith.constant dense<0.000000e+00> : vector<128x128xf32>
    %42 = tpu.matmul %41, %36, %cst_27 {dimension_numbers = #tpu.dot_dimension_numbers<[1], [0], [0], [1], [0, 0, 1, 1], [], []>} : vector<128x128xbf16>, vector<128x128xbf16>, vector<128x128xf32> -> vector<128x128xf32>
    %43 = arith.truncf %42 : vector<128x128xf32> to vector<128x128xbf16>
    %cst_28 = arith.constant dense<0.000000e+00> : vector<64x128xf32>
    %44 = tpu.matmul %0, %43, %cst_28 {dimension_numbers = #tpu.dot_dimension_numbers<[1], [0], [0], [1], [0, 0, 1, 1], [], []>} : vector<64x128xbf16>, vector<128x128xbf16>, vector<64x128xf32> -> vector<64x128xf32>
    %45 = vector.broadcast %1 : vector<64x1xf32> to vector<64x128xf32>
    %46 = arith.mulf %44, %45 : vector<64x128xf32>
    %47 = vector.broadcast %37 : vector<1x128xf32> to vector<64x128xf32>
    %48 = arith.addf %46, %47 : vector<64x128xf32>
    %cst_29 = arith.constant 0.000000e+00 : f32
    %49 = vector.broadcast %cst_29 : f32 to vector<64x128xf32>
    %50 = arith.maximumf %48, %49 : vector<64x128xf32>
    %51 = arith.truncf %50 : vector<64x128xf32> to vector<64x128xbf16>
    %c0_30 = arith.constant 0 : index
    %c0_31 = arith.constant 0 : index
    %52 = vector.load %arg10[%c0_30, %c0_31] : memref<128x128xbf16, #tpu.memory_space<vmem>>, vector<128x128xbf16>
    %cst_32 = arith.constant dense<0.000000e+00> : vector<64x128xf32>
    %53 = tpu.matmul %51, %52, %cst_32 {dimension_numbers = #tpu.dot_dimension_numbers<[1], [0], [0], [1], [0, 0, 1, 1], [], []>} : vector<64x128xbf16>, vector<128x128xbf16>, vector<64x128xf32> -> vector<64x128xf32>
    %c0_33 = arith.constant 0 : index
    %c0_34 = arith.constant 0 : index
    %54 = vector.load %arg11[%c0_33, %c0_34] : memref<1x128xf32, #tpu.memory_space<vmem>>, vector<1x128xf32>
    %55 = vector.broadcast %54 : vector<1x128xf32> to vector<64x128xf32>
    %56 = arith.addf %53, %55 : vector<64x128xf32>
    %cst_35 = arith.constant 0.000000e+00 : f32
    %57 = vector.broadcast %cst_35 : f32 to vector<64x128xf32>
    %58 = arith.maximumf %56, %57 : vector<64x128xf32>
    %59 = arith.truncf %58 : vector<64x128xf32> to vector<64x128xbf16>
    %c0_36 = arith.constant 0 : index
    %c0_37 = arith.constant 0 : index
    %60 = vector.load %arg12[%c0_36, %c0_37] : memref<128x128xbf16, #tpu.memory_space<vmem>>, vector<128x128xbf16>
    %cst_38 = arith.constant dense<0.000000e+00> : vector<64x128xf32>
    %61 = tpu.matmul %59, %60, %cst_38 {dimension_numbers = #tpu.dot_dimension_numbers<[1], [0], [0], [1], [0, 0, 1, 1], [], []>} : vector<64x128xbf16>, vector<128x128xbf16>, vector<64x128xf32> -> vector<64x128xf32>
    %c0_39 = arith.constant 0 : index
    %c0_40 = arith.constant 0 : index
    %62 = vector.load %arg13[%c0_39, %c0_40] : memref<1x128xf32, #tpu.memory_space<vmem>>, vector<1x128xf32>
    %63 = vector.broadcast %62 : vector<1x128xf32> to vector<64x128xf32>
    %64 = arith.addf %61, %63 : vector<64x128xf32>
    %c0_41 = arith.constant 0 : index
    %c0_42 = arith.constant 0 : index
    %65 = vector.load %arg14[%c0_41, %c0_42] : memref<64x128xf32, #tpu.memory_space<vmem>>, vector<64x128xf32>
    tpu.vector_store %arg14[%c0_41, %c0_42], %64 {strides = array<i32>} : memref<64x128xf32, #tpu.memory_space<vmem>>, vector<64x128xf32>,
    return
  }
}

</mosaic_0001>

<llo_original>
// kernel: tpu_custom_call.1
$region0: #{tpu_custom_call.1}
  #allocation0 [shape = 'u32[]', space=smem, size = 0x4, offset = 0x4, fixed_abs, tag = 'smem constant byte address 0x4 - core index']
  #allocation1 [shape = 'u32[144,128]{1,0:T(1,128)}', space=vmem, size = 0x12000, scoped, tag = 'internal scratch']
  %s0 = inlined_call_operand.hbm [shape: bf16[64,128], index: 0, kind: input, shape index: {}]
  %s1 = inlined_call_operand.hbm [shape: bf16[64,128], index: 1, kind: input, shape index: {}]
  %s2 = inlined_call_operand.vmem [shape: f32[64,1], index: 2, kind: input, shape index: {}]
  %s3 = inlined_call_operand.vmem [shape: f32[128,1], index: 3, kind: input, shape index: {}]
  %s4 = inlined_call_operand.vmem [shape: bf16[128,128], index: 4, kind: input, shape index: {}]
  %s5 = inlined_call_operand.vmem [shape: f32[1,128], index: 5, kind: input, shape index: {}]
  %s6 = inlined_call_operand.vmem [shape: bf16[128,128], index: 6, kind: input, shape index: {}]
  %s7 = inlined_call_operand.vmem [shape: f32[1,128], index: 7, kind: input, shape index: {}]
  %s8 = inlined_call_operand.vmem [shape: bf16[128,128], index: 8, kind: input, shape index: {}]
  %s9 = inlined_call_operand.vmem [shape: f32[1,128], index: 9, kind: input, shape index: {}]
  %s10 = inlined_call_operand.hbm [shape: bf16[128,128], index: 10, kind: input, shape index: {}]
  %s11 = inlined_call_operand.vmem [shape: f32[1,128], index: 11, kind: input, shape index: {}]
  %s12 = inlined_call_operand.hbm [shape: bf16[128,128], index: 12, kind: input, shape index: {}]
  %s13 = inlined_call_operand.vmem [shape: f32[1,128], index: 13, kind: input, shape index: {}]
  %s14 = inlined_call_operand.hbm [shape: f32[64,128], index: 14, kind: output, shape index: {}]
  %s15 = sld [smem:[#allocation0]]
  $region82: #{tpu_custom_call.1} parent=0
    _
  %s17 = ssub.s32 1, %s15
  %s18 = scalar_select 0, %s17, %s15
  $region1: #{tpu_custom_call.1} parent=0
    #allocation2 [shape = 'u8[16384]{0}', space=vmem, size = 0x4000, scoped, tag = 'input window, operand 0, single buffered']
    #allocation3 [shape = 's32[1]{0}', space=sflag, size = 0x4, scoped, tag = 'scoped memory for tpu_custom_call.1']
    #allocation4 [shape = 's32[1]{0}', space=sflag, size = 0x4, scoped, tag = 'scoped memory for tpu_custom_call.1']
    #allocation5 [shape = 'u8[16384]{0}', space=vmem, size = 0x4000, scoped, tag = 'input window, operand 1, single buffered']
    #allocation6 [shape = 's32[1]{0}', space=sflag, size = 0x4, scoped, tag = 'scoped memory for tpu_custom_call.1']
    #allocation7 [shape = 'u8[32768]{0}', space=vmem, size = 0x8000, scoped, tag = 'input window, operand 10, single buffered']
    #allocation8 [shape = 'u8[32768]{0}', space=vmem, size = 0x8000, scoped, tag = 'input window, operand 12, single buffered']
    #allocation9 [shape = 's32[1]{0}', space=sflag, size = 0x4, scoped, tag = 'scoped memory for tpu_custom_call.1']
    #allocation10 [shape = 'u8[32768]{0}', space=vmem, size = 0x8000, scoped, tag = 'output window, operand 0, single buffered']
    %19 = vsyncpa [#allocation3], 0
    %20 = vsyncpa [#allocation6], 0
    %21 = vsyncpa [#allocation9], 0
    %22 = vsyncpa [#allocation4], 0
    // Predicated region
    $region2: #{tpu_custom_call.1} parent=1 // pred_check
      _
    $region3: #{tpu_custom_call.1} parent=1 // pred_check_branch
      %24 = sbr.rel (0) target = $region5
    $region4: #{tpu_custom_call.1} parent=1 // pred_region
      %s26 = ssub.s32 512, 512
      %27 = vsyncadd [#allocation3], %s26
      %s28 = sshll.u32 [#allocation2], 4
      %s29 = int_to_ptr.vmem [resolvable:$true] %s28
      %34 = dma.hbm_to_vmem [thread:$0]  %s0, 512, %s29, [#allocation3], 64, 64, 4
    $region5: #{tpu_custom_call.1} parent=1 // pred_fallthru
      _
    // Predicated region
    $region6: #{tpu_custom_call.1} parent=1 // pred_check
      _
    $region7: #{tpu_custom_call.1} parent=1 // pred_check_branch
      %36 = sbr.rel (0) target = $region9
    $region8: #{tpu_custom_call.1} parent=1 // pred_region
      %s38 = ssub.s32 512, 512
      %39 = vsyncadd [#allocation6], %s38
      %s40 = sshll.u32 [#allocation5], 4
      %s41 = int_to_ptr.vmem [resolvable:$true] %s40
      %46 = dma.hbm_to_vmem [thread:$0]  %s1, 512, %s41, [#allocation6], 64, 64, 4
    $region9: #{tpu_custom_call.1} parent=1 // pred_fallthru
      _
    // Predicated region
    $region10: #{tpu_custom_call.1} parent=1 // pred_check
      _
    $region11: #{tpu_custom_call.1} parent=1 // pred_check_branch
      %48 = sbr.rel (0) target = $region13
    $region12: #{tpu_custom_call.1} parent=1 // pred_region
      _
    $region13: #{tpu_custom_call.1} parent=1 // pred_fallthru
      _
    // Predicated region
    $region14: #{tpu_custom_call.1} parent=1 // pred_check
      _
    $region15: #{tpu_custom_call.1} parent=1 // pred_check_branch
      %50 = sbr.rel (0) target = $region17
    $region16: #{tpu_custom_call.1} parent=1 // pred_region
      _
    $region17: #{tpu_custom_call.1} parent=1 // pred_fallthru
      _
    // Predicated region
    $region18: #{tpu_custom_call.1} parent=1 // pred_check
      _
    $region19: #{tpu_custom_call.1} parent=1 // pred_check_branch
      %52 = sbr.rel (0) target = $region21
    $region20: #{tpu_custom_call.1} parent=1 // pred_region
      _
    $region21: #{tpu_custom_call.1} parent=1 // pred_fallthru
      _
    // Predicated region
    $region22: #{tpu_custom_call.1} parent=1 // pred_check
      _
    $region23: #{tpu_custom_call.1} parent=1 // pred_check_branch
      %54 = sbr.rel (0) target = $region25
    $region24: #{tpu_custom_call.1} parent=1 // pred_region
      _
    $region25: #{tpu_custom_call.1} parent=1 // pred_fallthru
      _
    // Predicated region
    $region26: #{tpu_custom_call.1} parent=1 // pred_check
      _
    $region27: #{tpu_custom_call.1} parent=1 // pred_check_branch
      %56 = sbr.rel (0) target = $region29
    $region28: #{tpu_custom_call.1} parent=1 // pred_region
      _
    $region29: #{tpu_custom_call.1} parent=1 // pred_fallthru
      _
    // Predicated region
    $region30: #{tpu_custom_call.1} parent=1 // pred_check
      _
    $region31: #{tpu_custom_call.1} parent=1 // pred_check_branch
      %58 = sbr.rel (0) target = $region33
    $region32: #{tpu_custom_call.1} parent=1 // pred_region
      _
    $region33: #{tpu_custom_call.1} parent=1 // pred_fallthru
      _
    // Predicated region
    $region34: #{tpu_custom_call.1} parent=1 // pred_check
      _
    $region35: #{tpu_custom_call.1} parent=1 // pred_check_branch
      %60 = sbr.rel (0) target = $region37
    $region36: #{tpu_custom_call.1} parent=1 // pred_region
      _
    $region37: #{tpu_custom_call.1} parent=1 // pred_fallthru
      _
    // Predicated region
    $region38: #{tpu_custom_call.1} parent=1 // pred_check
      _
    $region39: #{tpu_custom_call.1} parent=1 // pred_check_branch
      %62 = sbr.rel (0) target = $region41
    $region40: #{tpu_custom_call.1} parent=1 // pred_region
      _
    $region41: #{tpu_custom_call.1} parent=1 // pred_fallthru
      _
    // Predicated region
    $region42: #{tpu_custom_call.1} parent=1 // pred_check
      _
    $region43: #{tpu_custom_call.1} parent=1 // pred_check_branch
      %64 = sbr.rel (0) target = $region45
    $region44: #{tpu_custom_call.1} parent=1 // pred_region
      %s66 = ssub.s32 1024, 1024
      %67 = vsyncadd [#allocation6], %s66
      %s68 = sshll.u32 [#allocation7], 4
      %s69 = int_to_ptr.vmem [resolvable:$true] %s68
      %74 = dma.hbm_to_vmem [thread:$0]  %s10, 1024, %s69, [#allocation6], 64, 64, 4
    $region45: #{tpu_custom_call.1} parent=1 // pred_fallthru
      _
    // Predicated region
    $region46: #{tpu_custom_call.1} parent=1 // pred_check
      _
    $region47: #{tpu_custom_call.1} parent=1 // pred_check_branch
      %76 = sbr.rel (0) target = $region49
    $region48: #{tpu_custom_call.1} parent=1 // pred_region
      _
    $region49: #{tpu_custom_call.1} parent=1 // pred_fallthru
      _
    // Predicated region
    $region50: #{tpu_custom_call.1} parent=1 // pred_check
      _
    $region51: #{tpu_custom_call.1} parent=1 // pred_check_branch
      %78 = sbr.rel (0) target = $region53
    $region52: #{tpu_custom_call.1} parent=1 // pred_region
      %s80 = ssub.s32 1024, 1024
      %81 = vsyncadd [#allocation9], %s80
      %s82 = sshll.u32 [#allocation8], 4
      %s83 = int_to_ptr.vmem [resolvable:$true] %s82
      %88 = dma.hbm_to_vmem [thread:$0]  %s12, 1024, %s83, [#allocation9], 64, 64, 4
    $region53: #{tpu_custom_call.1} parent=1 // pred_fallthru
      _
    // Predicated region
    $region54: #{tpu_custom_call.1} parent=1 // pred_check
      _
    $region55: #{tpu_custom_call.1} parent=1 // pred_check_branch
      %90 = sbr.rel (0) target = $region57
    $region56: #{tpu_custom_call.1} parent=1 // pred_region
      _
    $region57: #{tpu_custom_call.1} parent=1 // pred_fallthru
      _
    // Predicated region
    $region58: #{tpu_custom_call.1} parent=1 // pred_check
      _
    $region59: #{tpu_custom_call.1} parent=1 // pred_check_branch
      %92 = sbr.rel (0) target = $region61
    $region60: #{tpu_custom_call.1} parent=1 // pred_region
      %93 = dma.done [#allocation3], 512
    $region61: #{tpu_custom_call.1} parent=1 // pred_fallthru
      _
    // Predicated region
    $region62: #{tpu_custom_call.1} parent=1 // pred_check
      _
    $region63: #{tpu_custom_call.1} parent=1 // pred_check_branch
      %95 = sbr.rel (0) target = $region65
    $region64: #{tpu_custom_call.1} parent=1 // pred_region
      %96 = dma.done [#allocation6], 512
    $region65: #{tpu_custom_call.1} parent=1 // pred_fallthru
      _
    // Predicated region
    $region66: #{tpu_custom_call.1} parent=1 // pred_check
      _
    $region67: #{tpu_custom_call.1} parent=1 // pred_check_branch
      %98 = sbr.rel (0) target = $region69
    $region68: #{tpu_custom_call.1} parent=1 // pred_region
      %99 = dma.done [#allocation6], 1024
    $region69: #{tpu_custom_call.1} parent=1 // pred_fallthru
      _
    // Predicated region
    $region70: #{tpu_custom_call.1} parent=1 // pred_check
      _
    $region71: #{tpu_custom_call.1} parent=1 // pred_check_branch
      %101 = sbr.rel (0) target = $region73
    $region72: #{tpu_custom_call.1} parent=1 // pred_region
      %102 = dma.done [#allocation9], 1024
    $region73: #{tpu_custom_call.1} parent=1 // pred_fallthru
      _
    %v104 = vld [vmem:[#allocation5] sm:$0xf]
    %v105 = vld [vmem:[#allocation5 + $0x4] sm:$0xf]
    %v106 = vld [vmem:[#allocation5 + $0x8] sm:$0xf]
    %v107 = vld [vmem:[#allocation5 + $0xc] sm:$0xf]
    %v108 = vld [vmem:[#allocation5 + $0x10] sm:$0xf]
    %v109 = vld [vmem:[#allocation5 + $0x14] sm:$0xf]
    %v110 = vld [vmem:[#allocation5 + $0x18] sm:$0xf]
    %v111 = vld [vmem:[#allocation5 + $0x1c] sm:$0xf]
    %v112 = vld [vmem:[%s2] sm:$0xff]
    %v113 = vld [vmem:[%s2 + $0x8] sm:$0xff]
    %v114 = vld [vmem:[%s2 + $0x10] sm:$0xff]
    %v115 = vld [vmem:[%s2 + $0x18] sm:$0xff]
    %v116 = vld [vmem:[%s2 + $0x20] sm:$0xff]
    %v117 = vld [vmem:[%s2 + $0x28] sm:$0xff]
    %v118 = vld [vmem:[%s2 + $0x30] sm:$0xff]
    %v119 = vld [vmem:[%s2 + $0x38] sm:$0xff]
    %v120 = vld [vmem:[%s3] sm:$0xff]
    %v121 = vld [vmem:[%s3 + $0x8] sm:$0xff]
    %v122 = vld [vmem:[%s3 + $0x10] sm:$0xff]
    %v123 = vld [vmem:[%s3 + $0x18] sm:$0xff]
    %v124 = vld [vmem:[%s3 + $0x20] sm:$0xff]
    %v125 = vld [vmem:[%s3 + $0x28] sm:$0xff]
    %v126 = vld [vmem:[%s3 + $0x30] sm:$0xff]
    %v127 = vld [vmem:[%s3 + $0x38] sm:$0xff]
    %v128 = vld [vmem:[%s3 + $0x40] sm:$0xff]
    %v129 = vld [vmem:[%s3 + $0x48] sm:$0xff]
    %v130 = vld [vmem:[%s3 + $0x50] sm:$0xff]
    %v131 = vld [vmem:[%s3 + $0x58] sm:$0xff]
    %v132 = vld [vmem:[%s3 + $0x60] sm:$0xff]
    %v133 = vld [vmem:[%s3 + $0x68] sm:$0xff]
    %v134 = vld [vmem:[%s3 + $0x70] sm:$0xff]
    %v135 = vld [vmem:[%s3 + $0x78] sm:$0xff]
    %v136 = vld [vmem:[#allocation2] sm:$0xf]
    %v137 = vld [vmem:[#allocation2 + $0x4] sm:$0xf]
    %v138 = vld [vmem:[#allocation2 + $0x8] sm:$0xf]
    %v139 = vld [vmem:[#allocation2 + $0xc] sm:$0xf]
    %v140 = vld [vmem:[#allocation2 + $0x10] sm:$0xf]
    %v141 = vld [vmem:[#allocation2 + $0x14] sm:$0xf]
    %v142 = vld [vmem:[#allocation2 + $0x18] sm:$0xf]
    %v143 = vld [vmem:[#allocation2 + $0x1c] sm:$0xf]
    %v144 = vld [vmem:[%s4] sm:$0xf]
    %v145 = vld [vmem:[%s4 + $0x4] sm:$0xf]
    %v146 = vld [vmem:[%s4 + $0x8] sm:$0xf]
    %v147 = vld [vmem:[%s4 + $0xc] sm:$0xf]
    %v148 = vld [vmem:[%s4 + $0x10] sm:$0xf]
    %v149 = vld [vmem:[%s4 + $0x14] sm:$0xf]
    %v150 = vld [vmem:[%s4 + $0x18] sm:$0xf]
    %v151 = vld [vmem:[%s4 + $0x1c] sm:$0xf]
    %v152 = vld [vmem:[%s4 + $0x20] sm:$0xf]
    %v153 = vld [vmem:[%s4 + $0x24] sm:$0xf]
    %v154 = vld [vmem:[%s4 + $0x28] sm:$0xf]
    %v155 = vld [vmem:[%s4 + $0x2c] sm:$0xf]
    %v156 = vld [vmem:[%s4 + $0x30] sm:$0xf]
    %v157 = vld [vmem:[%s4 + $0x34] sm:$0xf]
    %v158 = vld [vmem:[%s4 + $0x38] sm:$0xf]
    %v159 = vld [vmem:[%s4 + $0x3c] sm:$0xf]
    %v160 = vld [vmem:[%s5] sm:$0x1]
    %v169 = vunpack.c.l.b16 %v104
    %v170 = vunpack.c.l.b16 %v105
    %v171 = vunpack.c.l.b16 %v106
    %v172 = vunpack.c.l.b16 %v107
    %v173 = vunpack.c.l.b16 %v108
    %v174 = vunpack.c.l.b16 %v109
    %v175 = vunpack.c.l.b16 %v110
    %v176 = vunpack.c.l.b16 %v111
    %v177 = vpack.c.b16 %v170, %v169
    %v178 = vpack.c.b16 %v172, %v171
    %v179 = vpack.c.b16 %v174, %v173
    %v180 = vpack.c.b16 %v176, %v175
    %185 = vxpose.xlu0.c.b16.start [1/8] %v177, 128
    %186 = vxpose.xlu0.c.b16.cont [2/8] %v178, 128
    %187 = vxpose.xlu0.c.b16.cont [3/8] %v179, 128
    %188 = vxpose.xlu0.c.b16.cont [4/8] %v180, 128
    %189 = vxpose.xlu0.c.b16.cont [5/8] 0, 128
    %190 = vxpose.xlu0.c.b16.cont [6/8] 0, 128
    %191 = vxpose.xlu0.c.b16.cont [7/8] 0, 128
    %192 = vxpose.xlu0.c.b16.end [8/8] 0, 128
    %v193 = vpop.trf.xlu0
    %v194 = vpop.trf.xlu0
    %v195 = vpop.trf.xlu0
    %v196 = vpop.trf.xlu0
    %v197 = vpop.trf.xlu0
    %v198 = vpop.trf.xlu0
    %v199 = vpop.trf.xlu0
    %v200 = vpop.trf.xlu0
    %v209 = vunpack.c.l.b16 %v136
    %v210 = vunpack.c.l.b16 %v137
    %v211 = vunpack.c.l.b16 %v138
    %v212 = vunpack.c.l.b16 %v139
    %v213 = vunpack.c.l.b16 %v140
    %v214 = vunpack.c.l.b16 %v141
    %v215 = vunpack.c.l.b16 %v142
    %v216 = vunpack.c.l.b16 %v143
    %v217 = vpack.c.b16 %v210, %v209
    %v218 = vpack.c.b16 %v212, %v211
    %v219 = vpack.c.b16 %v214, %v213
    %v220 = vpack.c.b16 %v216, %v215
    %vm225 = vcmask 523264
    %v227 = vsel %vm225, %v193, 0
    %v230 = vsel %vm225, %v194, 0
    %v233 = vsel %vm225, %v195, 0
    %v236 = vsel %vm225, %v196, 0
    %v239 = vsel %vm225, %v197, 0
    %v242 = vsel %vm225, %v198, 0
    %v245 = vsel %vm225, %v199, 0
    %v248 = vsel %vm225, %v200, 0
    %250 = vmatprep.subr.bf16.mxu0 0
    %251 = vmatpush1.bf16.msra.mxu0 0
    %252 = vmatprep.subr.bf16.mxu0 0
    %253 = vmatpush1.bf16.msra.mxu0 0
    %254 = vmatprep.subr.bf16.mxu0 0
    %255 = vmatpush1.bf16.msra.mxu0 0
    %256 = vmatprep.subr.bf16.mxu0 0
    %257 = vmatpush1.bf16.msra.mxu0 0
    %258 = vmatprep.subr.bf16.mxu0 0
    %259 = vmatpush1.bf16.msra.mxu0 %v220
    %260 = vmatprep.subr.bf16.mxu0 0
    %261 = vmatpush1.bf16.msra.mxu0 %v219
    %262 = vmatprep.subr.bf16.mxu0 0
    %263 = vmatpush1.bf16.msra.mxu0 %v218
    %264 = vmatprep.subr.bf16.mxu0 0
    %265 = vmatpush1.bf16.msra.mxu0 %v217
    %266 = vmatprep.subr.bf16.mxu0 0
    %267 = vmatpush2.bf16.msra.mxu0 0
    %268 = vmatprep.subr.bf16.mxu0 0
    %269 = vmatpush2.bf16.msra.mxu0 0
    %270 = vmatprep.subr.bf16.mxu0 0
    %271 = vmatpush2.bf16.msra.mxu0 0
    %272 = vmatprep.subr.bf16.mxu0 0
    %273 = vmatpush2.bf16.msra.mxu0 0
    %274 = vmatprep.subr.bf16.mxu0 0
    %275 = vmatpush2.bf16.msra.mxu0 0
    %276 = vmatprep.subr.bf16.mxu0 0
    %277 = vmatpush2.bf16.msra.mxu0 0
    %278 = vmatprep.subr.bf16.mxu0 0
    %279 = vmatpush2.bf16.msra.mxu0 0
    %280 = vmatprep.subr.bf16.mxu0 0
    %281 = vmatpush2.bf16.msra.mxu0 0
    %282 = vmatprep.mubr.bf16.mxu0 0
    %283 = vmatmul.mubr.bf16.gmra.mxu0 %v227
    %v284 = vpop.f32.mrf.mxu0
    %v285 = vadd.f32 0.0, %v284
    %v286 = vpop.f32.mrf.mxu0
    %v287 = vpop.f32.mrf.mxu0
    %v288 = vadd.f32 0.0, %v287
    %v289 = vpop.f32.mrf.mxu0
    %290 = vmatprep.mubr.bf16.mxu0 0
    %291 = vmatmul.mubr.bf16.gmra.mxu0 %v230
    %v292 = vpop.f32.mrf.mxu0
    %v293 = vadd.f32 0.0, %v292
    %v294 = vpop.f32.mrf.mxu0
    %v295 = vpop.f32.mrf.mxu0
    %v296 = vadd.f32 0.0, %v295
    %v297 = vpop.f32.mrf.mxu0
    %298 = vmatprep.mubr.bf16.mxu0 0
    %299 = vmatmul.mubr.bf16.gmra.mxu0 %v233
    %v300 = vpop.f32.mrf.mxu0
    %v301 = vadd.f32 0.0, %v300
    %v302 = vpop.f32.mrf.mxu0
    %v303 = vpop.f32.mrf.mxu0
    %v304 = vadd.f32 0.0, %v303
    %v305 = vpop.f32.mrf.mxu0
    %306 = vmatprep.mubr.bf16.mxu0 0
    %307 = vmatmul.mubr.bf16.gmra.mxu0 %v236
    %v308 = vpop.f32.mrf.mxu0
    %v309 = vadd.f32 0.0, %v308
    %v310 = vpop.f32.mrf.mxu0
    %v311 = vpop.f32.mrf.mxu0
    %v312 = vadd.f32 0.0, %v311
    %v313 = vpop.f32.mrf.mxu0
    %314 = vmatprep.mubr.bf16.mxu0 0
    %315 = vmatmul.mubr.bf16.gmra.mxu0 %v239
    %v316 = vpop.f32.mrf.mxu0
    %v317 = vadd.f32 0.0, %v316
    %v318 = vpop.f32.mrf.mxu0
    %v319 = vpop.f32.mrf.mxu0
    %v320 = vadd.f32 0.0, %v319
    %v321 = vpop.f32.mrf.mxu0
    %322 = vmatprep.mubr.bf16.mxu0 0
    %323 = vmatmul.mubr.bf16.gmra.mxu0 %v242
    %v324 = vpop.f32.mrf.mxu0
    %v325 = vadd.f32 0.0, %v324
    %v326 = vpop.f32.mrf.mxu0
    %v327 = vpop.f32.mrf.mxu0
    %v328 = vadd.f32 0.0, %v327
    %v329 = vpop.f32.mrf.mxu0
    %330 = vmatprep.mubr.bf16.mxu0 0
    %331 = vmatmul.mubr.bf16.gmra.mxu0 %v245
    %v332 = vpop.f32.mrf.mxu0
    %v333 = vadd.f32 0.0, %v332
    %v334 = vpop.f32.mrf.mxu0
    %v335 = vpop.f32.mrf.mxu0
    %v336 = vadd.f32 0.0, %v335
    %v337 = vpop.f32.mrf.mxu0
    %338 = vmatprep.mubr.bf16.mxu0 0
    %339 = vmatmul.mubr.bf16.gmra.mxu0 %v248
    %v340 = vpop.f32.mrf.mxu0
    %v341 = vadd.f32 0.0, %v340
    %v342 = vpop.f32.mrf.mxu0
    %v343 = vpop.f32.mrf.mxu0
    %v344 = vadd.f32 0.0, %v343
    %v345 = vpop.f32.mrf.mxu0
    %346 = vdwg.mxu0
    %348 = vset.pattern.permute.xlu0 0
    %349 = vperm.xlu0 %348, %v120
    %v350 = vpop.permute.xlu0 %349
    %353 = vset.pattern.permute.xlu0 0
    %354 = vperm.xlu0 %353, %v121
    %v355 = vpop.permute.xlu0 %354
    %358 = vset.pattern.permute.xlu0 0
    %359 = vperm.xlu0 %358, %v122
    %v360 = vpop.permute.xlu0 %359
    %363 = vset.pattern.permute.xlu0 0
    %364 = vperm.xlu0 %363, %v123
    %v365 = vpop.permute.xlu0 %364
    %368 = vset.pattern.permute.xlu0 0
    %369 = vperm.xlu0 %368, %v124
    %v370 = vpop.permute.xlu0 %369
    %373 = vset.pattern.permute.xlu0 0
    %374 = vperm.xlu0 %373, %v125
    %v375 = vpop.permute.xlu0 %374
    %378 = vset.pattern.permute.xlu0 0
    %379 = vperm.xlu0 %378, %v126
    %v380 = vpop.permute.xlu0 %379
    %383 = vset.pattern.permute.xlu0 0
    %384 = vperm.xlu0 %383, %v127
    %v385 = vpop.permute.xlu0 %384
    %388 = vset.pattern.permute.xlu0 0
    %389 = vperm.xlu0 %388, %v128
    %v390 = vpop.permute.xlu0 %389
    %393 = vset.pattern.permute.xlu0 0
    %394 = vperm.xlu0 %393, %v129
    %v395 = vpop.permute.xlu0 %394
    %398 = vset.pattern.permute.xlu0 0
    %399 = vperm.xlu0 %398, %v130
    %v400 = vpop.permute.xlu0 %399
    %403 = vset.pattern.permute.xlu0 0
    %404 = vperm.xlu0 %403, %v131
    %v405 = vpop.permute.xlu0 %404
    %408 = vset.pattern.permute.xlu0 0
    %409 = vperm.xlu0 %408, %v132
    %v410 = vpop.permute.xlu0 %409
    %413 = vset.pattern.permute.xlu0 0
    %414 = vperm.xlu0 %413, %v133
    %v415 = vpop.permute.xlu0 %414
    %418 = vset.pattern.permute.xlu0 0
    %419 = vperm.xlu0 %418, %v134
    %v420 = vpop.permute.xlu0 %419
    %423 = vset.pattern.permute.xlu0 0
    %424 = vperm.xlu0 %423, %v135
    %v425 = vpop.permute.xlu0 %424
    %v427 = vmul.f32 %v285, %v350
    %v428 = vmul.f32 %v288, %v355
    %v429 = vmul.f32 %v293, %v360
    %v430 = vmul.f32 %v296, %v365
    %v431 = vmul.f32 %v301, %v370
    %v432 = vmul.f32 %v304, %v375
    %v433 = vmul.f32 %v309, %v380
    %v434 = vmul.f32 %v312, %v385
    %v435 = vmul.f32 %v317, %v390
    %v436 = vmul.f32 %v320, %v395
    %v437 = vmul.f32 %v325, %v400
    %v438 = vmul.f32 %v328, %v405
    %v439 = vmul.f32 %v333, %v410
    %v440 = vmul.f32 %v336, %v415
    %v441 = vmul.f32 %v341, %v420
    %v442 = vmul.f32 %v344, %v425
    %v443 = vpack.c.bf16 %v428, %v427
    %v444 = vpack.c.bf16 %v430, %v429
    %v445 = vpack.c.bf16 %v432, %v431
    %v446 = vpack.c.bf16 %v434, %v433
    %v447 = vpack.c.bf16 %v436, %v435
    %v448 = vpack.c.bf16 %v438, %v437
    %v449 = vpack.c.bf16 %v440, %v439
    %v450 = vpack.c.bf16 %v442, %v441
    %v467 = vunpack.c.l.b16 %v144
    %v468 = vunpack.c.l.b16 %v145
    %v469 = vunpack.c.l.b16 %v146
    %v470 = vunpack.c.l.b16 %v147
    %v471 = vunpack.c.l.b16 %v148
    %v472 = vunpack.c.l.b16 %v149
    %v473 = vunpack.c.l.b16 %v150
    %v474 = vunpack.c.l.b16 %v151
    %v475 = vunpack.c.l.b16 %v152
    %v476 = vunpack.c.l.b16 %v153
    %v477 = vunpack.c.l.b16 %v154
    %v478 = vunpack.c.l.b16 %v155
    %v479 = vunpack.c.l.b16 %v156
    %v480 = vunpack.c.l.b16 %v157
    %v481 = vunpack.c.l.b16 %v158
    %v482 = vunpack.c.l.b16 %v159
    %v483 = vpack.c.b16 %v468, %v467
    %v484 = vpack.c.b16 %v470, %v469
    %v485 = vpack.c.b16 %v472, %v471
    %v486 = vpack.c.b16 %v474, %v473
    %v487 = vpack.c.b16 %v476, %v475
    %v488 = vpack.c.b16 %v478, %v477
    %v489 = vpack.c.b16 %v480, %v479
    %v490 = vpack.c.b16 %v482, %v481
    %499 = vmatprep.subr.bf16.mxu0 0
    %500 = vmatpush1.bf16.msra.mxu0 %v490
    %501 = vmatprep.subr.bf16.mxu0 0
    %502 = vmatpush1.bf16.msra.mxu0 %v489
    %503 = vmatprep.subr.bf16.mxu0 0
    %504 = vmatpush1.bf16.msra.mxu0 %v488
    %505 = vmatprep.subr.bf16.mxu0 0
    %506 = vmatpush1.bf16.msra.mxu0 %v487
    %507 = vmatprep.subr.bf16.mxu0 0
    %508 = vmatpush1.bf16.msra.mxu0 %v486
    %509 = vmatprep.subr.bf16.mxu0 0
    %510 = vmatpush1.bf16.msra.mxu0 %v485
    %511 = vmatprep.subr.bf16.mxu0 0
    %512 = vmatpush1.bf16.msra.mxu0 %v484
    %513 = vmatprep.subr.bf16.mxu0 0
    %514 = vmatpush1.bf16.msra.mxu0 %v483
    %515 = vmatprep.subr.bf16.mxu0 0
    %516 = vmatpush2.bf16.msra.mxu0 0
    %517 = vmatprep.subr.bf16.mxu0 0
    %518 = vmatpush2.bf16.msra.mxu0 0
    %519 = vmatprep.subr.bf16.mxu0 0
    %520 = vmatpush2.bf16.msra.mxu0 0
    %521 = vmatprep.subr.bf16.mxu0 0
    %522 = vmatpush2.bf16.msra.mxu0 0
    %523 = vmatprep.subr.bf16.mxu0 0
    %524 = vmatpush2.bf16.msra.mxu0 0
    %525 = vmatprep.subr.bf16.mxu0 0
    %526 = vmatpush2.bf16.msra.mxu0 0
    %527 = vmatprep.subr.bf16.mxu0 0
    %528 = vmatpush2.bf16.msra.mxu0 0
    %529 = vmatprep.subr.bf16.mxu0 0
    %530 = vmatpush2.bf16.msra.mxu0 0
    %531 = vmatprep.mubr.bf16.mxu0 0
    %532 = vmatmul.mubr.bf16.gmra.mxu0 %v443
    %v533 = vpop.f32.mrf.mxu0
    %v534 = vadd.f32 0.0, %v533
    %v535 = vpop.f32.mrf.mxu0
    %v536 = vpop.f32.mrf.mxu0
    %v537 = vadd.f32 0.0, %v536
    %v538 = vpop.f32.mrf.mxu0
    %539 = vmatprep.mubr.bf16.mxu0 0
    %540 = vmatmul.mubr.bf16.gmra.mxu0 %v444
    %v541 = vpop.f32.mrf.mxu0
    %v542 = vadd.f32 0.0, %v541
    %v543 = vpop.f32.mrf.mxu0
    %v544 = vpop.f32.mrf.mxu0
    %v545 = vadd.f32 0.0, %v544
    %v546 = vpop.f32.mrf.mxu0
    %547 = vmatprep.mubr.bf16.mxu0 0
    %548 = vmatmul.mubr.bf16.gmra.mxu0 %v445
    %v549 = vpop.f32.mrf.mxu0
    %v550 = vadd.f32 0.0, %v549
    %v551 = vpop.f32.mrf.mxu0
    %v552 = vpop.f32.mrf.mxu0
    %v553 = vadd.f32 0.0, %v552
    %v554 = vpop.f32.mrf.mxu0
    %555 = vmatprep.mubr.bf16.mxu0 0
    %556 = vmatmul.mubr.bf16.gmra.mxu0 %v446
    %v557 = vpop.f32.mrf.mxu0
    %v558 = vadd.f32 0.0, %v557
    %v559 = vpop.f32.mrf.mxu0
    %v560 = vpop.f32.mrf.mxu0
    %v561 = vadd.f32 0.0, %v560
    %v562 = vpop.f32.mrf.mxu0
    %563 = vmatprep.mubr.bf16.mxu0 0
    %564 = vmatmul.mubr.bf16.gmra.mxu0 %v447
    %v565 = vpop.f32.mrf.mxu0
    %v566 = vadd.f32 0.0, %v565
    %v567 = vpop.f32.mrf.mxu0
    %v568 = vpop.f32.mrf.mxu0
    %v569 = vadd.f32 0.0, %v568
    %v570 = vpop.f32.mrf.mxu0
    %571 = vmatprep.mubr.bf16.mxu0 0
    %572 = vmatmul.mubr.bf16.gmra.mxu0 %v448
    %v573 = vpop.f32.mrf.mxu0
    %v574 = vadd.f32 0.0, %v573
    %v575 = vpop.f32.mrf.mxu0
    %v576 = vpop.f32.mrf.mxu0
    %v577 = vadd.f32 0.0, %v576
    %v578 = vpop.f32.mrf.mxu0
    %579 = vmatprep.mubr.bf16.mxu0 0
    %580 = vmatmul.mubr.bf16.gmra.mxu0 %v449
    %v581 = vpop.f32.mrf.mxu0
    %v582 = vadd.f32 0.0, %v581
    %v583 = vpop.f32.mrf.mxu0
    %v584 = vpop.f32.mrf.mxu0
    %v585 = vadd.f32 0.0, %v584
    %v586 = vpop.f32.mrf.mxu0
    %587 = vmatprep.mubr.bf16.mxu0 0
    %588 = vmatmul.mubr.bf16.gmra.mxu0 %v450
    %v589 = vpop.f32.mrf.mxu0
    %v590 = vadd.f32 0.0, %v589
    %v591 = vpop.f32.mrf.mxu0
    %v592 = vpop.f32.mrf.mxu0
    %v593 = vadd.f32 0.0, %v592
    %v594 = vpop.f32.mrf.mxu0
    %595 = vdwg.mxu0
    %v596 = vpack.c.bf16 %v537, %v534
    %v597 = vpack.c.bf16 %v545, %v542
    %v598 = vpack.c.bf16 %v553, %v550
    %v599 = vpack.c.bf16 %v561, %v558
    %v600 = vpack.c.bf16 %v569, %v566
    %v601 = vpack.c.bf16 %v577, %v574
    %v602 = vpack.c.bf16 %v585, %v582
    %v603 = vpack.c.bf16 %v593, %v590
    %604 = vmatprep.subr.bf16.mxu0 0
    %605 = vmatpush1.bf16.msra.mxu0 %v603
    %606 = vmatprep.subr.bf16.mxu0 0
    %607 = vmatpush1.bf16.msra.mxu0 %v602
    %608 = vmatprep.subr.bf16.mxu0 0
    %609 = vmatpush1.bf16.msra.mxu0 %v601
    %610 = vmatprep.subr.bf16.mxu0 0
    %611 = vmatpush1.bf16.msra.mxu0 %v600
    %612 = vmatprep.subr.bf16.mxu0 0
    %613 = vmatpush1.bf16.msra.mxu0 %v599
    %614 = vmatprep.subr.bf16.mxu0 0
    %615 = vmatpush1.bf16.msra.mxu0 %v598
    %616 = vmatprep.subr.bf16.mxu0 0
    %617 = vmatpush1.bf16.msra.mxu0 %v597
    %618 = vmatprep.subr.bf16.mxu0 0
    %619 = vmatpush1.bf16.msra.mxu0 %v596
    %620 = vmatprep.subr.bf16.mxu0 0
    %621 = vmatpush2.bf16.msra.mxu0 0
    %622 = vmatprep.subr.bf16.mxu0 0
    %623 = vmatpush2.bf16.msra.mxu0 0
    %624 = vmatprep.subr.bf16.mxu0 0
    %625 = vmatpush2.bf16.msra.mxu0 0
    %626 = vmatprep.subr.bf16.mxu0 0
    %627 = vmatpush2.bf16.msra.mxu0 0
    %628 = vmatprep.subr.bf16.mxu0 0
    %629 = vmatpush2.bf16.msra.mxu0 0
    %630 = vmatprep.subr.bf16.mxu0 0
    %631 = vmatpush2.bf16.msra.mxu0 0
    %632 = vmatprep.subr.bf16.mxu0 0
    %633 = vmatpush2.bf16.msra.mxu0 0
    %634 = vmatprep.subr.bf16.mxu0 0
    %635 = vmatpush2.bf16.msra.mxu0 0
    %636 = vmatprep.mubr.bf16.mxu0 0
    %637 = vmatmul.mubr.bf16.gmra.mxu0 %v177
    %v638 = vpop.f32.mrf.mxu0
    %v639 = vadd.f32 0.0, %v638
    %v640 = vpop.f32.mrf.mxu0
    %v641 = vpop.f32.mrf.mxu0
    %v642 = vadd.f32 0.0, %v641
    %v643 = vpop.f32.mrf.mxu0
    %644 = vmatprep.mubr.bf16.mxu0 0
    %645 = vmatmul.mubr.bf16.gmra.mxu0 %v178
    %v646 = vpop.f32.mrf.mxu0
    %v647 = vadd.f32 0.0, %v646
    %v648 = vpop.f32.mrf.mxu0
    %v649 = vpop.f32.mrf.mxu0
    %v650 = vadd.f32 0.0, %v649
    %v651 = vpop.f32.mrf.mxu0
    %652 = vmatprep.mubr.bf16.mxu0 0
    %653 = vmatmul.mubr.bf16.gmra.mxu0 %v179
    %v654 = vpop.f32.mrf.mxu0
    %v655 = vadd.f32 0.0, %v654
    %v656 = vpop.f32.mrf.mxu0
    %v657 = vpop.f32.mrf.mxu0
    %v658 = vadd.f32 0.0, %v657
    %v659 = vpop.f32.mrf.mxu0
    %660 = vmatprep.mubr.bf16.mxu0 0
    %661 = vmatmul.mubr.bf16.gmra.mxu0 %v180
    %v662 = vpop.f32.mrf.mxu0
    %v663 = vadd.f32 0.0, %v662
    %v664 = vpop.f32.mrf.mxu0
    %v665 = vpop.f32.mrf.mxu0
    %v666 = vadd.f32 0.0, %v665
    %v667 = vpop.f32.mrf.mxu0
    %668 = vdwg.mxu0
    %670 = vset.pattern.permute.xlu0 0
    %671 = vperm.xlu0 %670, %v112
    %v672 = vpop.permute.xlu0 %671
    %675 = vset.pattern.permute.xlu0 0
    %676 = vperm.xlu0 %675, %v113
    %v677 = vpop.permute.xlu0 %676
    %680 = vset.pattern.permute.xlu0 0
    %681 = vperm.xlu0 %680, %v114
    %v682 = vpop.permute.xlu0 %681
    %685 = vset.pattern.permute.xlu0 0
    %686 = vperm.xlu0 %685, %v115
    %v687 = vpop.permute.xlu0 %686
    %690 = vset.pattern.permute.xlu0 0
    %691 = vperm.xlu0 %690, %v116
    %v692 = vpop.permute.xlu0 %691
    %695 = vset.pattern.permute.xlu0 0
    %696 = vperm.xlu0 %695, %v117
    %v697 = vpop.permute.xlu0 %696
    %700 = vset.pattern.permute.xlu0 0
    %701 = vperm.xlu0 %700, %v118
    %v702 = vpop.permute.xlu0 %701
    %705 = vset.pattern.permute.xlu0 0
    %706 = vperm.xlu0 %705, %v119
    %v707 = vpop.permute.xlu0 %706
    %v709 = vmul.f32 %v639, %v672
    %v710 = vmul.f32 %v642, %v677
    %v711 = vmul.f32 %v647, %v682
    %v712 = vmul.f32 %v650, %v687
    %v713 = vmul.f32 %v655, %v692
    %v714 = vmul.f32 %v658, %v697
    %v715 = vmul.f32 %v663, %v702
    %v716 = vmul.f32 %v666, %v707
    %v718 = vlaneseq
    %v719 = vshrl.u32 %v718, 7
    %v720 = vsub.s32 0, %v719
    %v721 = vrot.slane %v160, %v720
    %v723 = vadd.f32 %v709, %v721
    %v724 = vadd.f32 %v710, %v721
    %v725 = vadd.f32 %v711, %v721
    %v726 = vadd.f32 %v712, %v721
    %v727 = vadd.f32 %v713, %v721
    %v728 = vadd.f32 %v714, %v721
    %v729 = vadd.f32 %v715, %v721
    %v730 = vadd.f32 %v716, %v721
    %v731 = vmax.f32 %v723, 0.0
    %v732 = vmax.f32 %v724, 0.0
    %v733 = vmax.f32 %v725, 0.0
    %v734 = vmax.f32 %v726, 0.0
    %v735 = vmax.f32 %v727, 0.0
    %v736 = vmax.f32 %v728, 0.0
    %v737 = vmax.f32 %v729, 0.0
    %v738 = vmax.f32 %v730, 0.0
    %v739 = vpack.c.bf16 %v732, %v731
    %v740 = vpack.c.bf16 %v734, %v733
    %v741 = vpack.c.bf16 %v736, %v735
    %v742 = vpack.c.bf16 %v738, %v737
    %v743 = vld [vmem:[%s6] sm:$0xf]
    %v744 = vld [vmem:[%s6 + $0x4] sm:$0xf]
    %v745 = vld [vmem:[%s6 + $0x8] sm:$0xf]
    %v746 = vld [vmem:[%s6 + $0xc] sm:$0xf]
    %v747 = vld [vmem:[%s6 + $0x10] sm:$0xf]
    %v748 = vld [vmem:[%s6 + $0x14] sm:$0xf]
    %v749 = vld [vmem:[%s6 + $0x18] sm:$0xf]
    %v750 = vld [vmem:[%s6 + $0x1c] sm:$0xf]
    %v751 = vld [vmem:[%s6 + $0x20] sm:$0xf]
    %v752 = vld [vmem:[%s6 + $0x24] sm:$0xf]
    %v753 = vld [vmem:[%s6 + $0x28] sm:$0xf]
    %v754 = vld [vmem:[%s6 + $0x2c] sm:$0xf]
    %v755 = vld [vmem:[%s6 + $0x30] sm:$0xf]
    %v756 = vld [vmem:[%s6 + $0x34] sm:$0xf]
    %v757 = vld [vmem:[%s6 + $0x38] sm:$0xf]
    %v758 = vld [vmem:[%s6 + $0x3c] sm:$0xf]
    %v759 = vld [vmem:[%s7] sm:$0x1]
    %760 = vmatprep.subr.bf16.mxu0 0
    %761 = vmatpush1.bf16.msra.mxu0 0
    %762 = vmatprep.subr.bf16.mxu0 0
    %763 = vmatpush1.bf16.msra.mxu0 0
    %764 = vmatprep.subr.bf16.mxu0 0
    %765 = vmatpush1.bf16.msra.mxu0 0
    %766 = vmatprep.subr.bf16.mxu0 0
    %767 = vmatpush1.bf16.msra.mxu0 0
    %768 = vmatprep.subr.bf16.mxu0 0
    %769 = vmatpush1.bf16.msra.mxu0 %v742
    %770 = vmatprep.subr.bf16.mxu0 0
    %771 = vmatpush1.bf16.msra.mxu0 %v741
    %772 = vmatprep.subr.bf16.mxu0 0
    %773 = vmatpush1.bf16.msra.mxu0 %v740
    %774 = vmatprep.subr.bf16.mxu0 0
    %775 = vmatpush1.bf16.msra.mxu0 %v739
    %776 = vmatprep.subr.bf16.mxu0 0
    %777 = vmatpush2.bf16.msra.mxu0 0
    %778 = vmatprep.subr.bf16.mxu0 0
    %779 = vmatpush2.bf16.msra.mxu0 0
    %780 = vmatprep.subr.bf16.mxu0 0
    %781 = vmatpush2.bf16.msra.mxu0 0
    %782 = vmatprep.subr.bf16.mxu0 0
    %783 = vmatpush2.bf16.msra.mxu0 0
    %784 = vmatprep.subr.bf16.mxu0 0
    %785 = vmatpush2.bf16.msra.mxu0 0
    %786 = vmatprep.subr.bf16.mxu0 0
    %787 = vmatpush2.bf16.msra.mxu0 0
    %788 = vmatprep.subr.bf16.mxu0 0
    %789 = vmatpush2.bf16.msra.mxu0 0
    %790 = vmatprep.subr.bf16.mxu0 0
    %791 = vmatpush2.bf16.msra.mxu0 0
    %792 = vmatprep.mubr.bf16.mxu0 0
    %793 = vmatmul.mubr.bf16.gmra.mxu0 %v227
    %v794 = vpop.f32.mrf.mxu0
    %v795 = vadd.f32 0.0, %v794
    %v796 = vpop.f32.mrf.mxu0
    %v797 = vpop.f32.mrf.mxu0
    %v798 = vadd.f32 0.0, %v797
    %v799 = vpop.f32.mrf.mxu0
    %800 = vmatprep.mubr.bf16.mxu0 0
    %801 = vmatmul.mubr.bf16.gmra.mxu0 %v230
    %v802 = vpop.f32.mrf.mxu0
    %v803 = vadd.f32 0.0, %v802
    %v804 = vpop.f32.mrf.mxu0
    %v805 = vpop.f32.mrf.mxu0
    %v806 = vadd.f32 0.0, %v805
    %v807 = vpop.f32.mrf.mxu0
    %808 = vmatprep.mubr.bf16.mxu0 0
    %809 = vmatmul.mubr.bf16.gmra.mxu0 %v233
    %v810 = vpop.f32.mrf.mxu0
    %v811 = vadd.f32 0.0, %v810
    %v812 = vpop.f32.mrf.mxu0
    %v813 = vpop.f32.mrf.mxu0
    %v814 = vadd.f32 0.0, %v813
    %v815 = vpop.f32.mrf.mxu0
    %816 = vmatprep.mubr.bf16.mxu0 0
    %817 = vmatmul.mubr.bf16.gmra.mxu0 %v236
    %v818 = vpop.f32.mrf.mxu0
    %v819 = vadd.f32 0.0, %v818
    %v820 = vpop.f32.mrf.mxu0
    %v821 = vpop.f32.mrf.mxu0
    %v822 = vadd.f32 0.0, %v821
    %v823 = vpop.f32.mrf.mxu0
    %824 = vmatprep.mubr.bf16.mxu0 0
    %825 = vmatmul.mubr.bf16.gmra.mxu0 %v239
    %v826 = vpop.f32.mrf.mxu0
    %v827 = vadd.f32 0.0, %v826
    %v828 = vpop.f32.mrf.mxu0
    %v829 = vpop.f32.mrf.mxu0
    %v830 = vadd.f32 0.0, %v829
    %v831 = vpop.f32.mrf.mxu0
    %832 = vmatprep.mubr.bf16.mxu0 0
    %833 = vmatmul.mubr.bf16.gmra.mxu0 %v242
    %v834 = vpop.f32.mrf.mxu0
    %v835 = vadd.f32 0.0, %v834
    %v836 = vpop.f32.mrf.mxu0
    %v837 = vpop.f32.mrf.mxu0
    %v838 = vadd.f32 0.0, %v837
    %v839 = vpop.f32.mrf.mxu0
    %840 = vmatprep.mubr.bf16.mxu0 0
    %841 = vmatmul.mubr.bf16.gmra.mxu0 %v245
    %v842 = vpop.f32.mrf.mxu0
    %v843 = vadd.f32 0.0, %v842
    %v844 = vpop.f32.mrf.mxu0
    %v845 = vpop.f32.mrf.mxu0
    %v846 = vadd.f32 0.0, %v845
    %v847 = vpop.f32.mrf.mxu0
    %848 = vmatprep.mubr.bf16.mxu0 0
    %849 = vmatmul.mubr.bf16.gmra.mxu0 %v248
    %v850 = vpop.f32.mrf.mxu0
    %v851 = vadd.f32 0.0, %v850
    %v852 = vpop.f32.mrf.mxu0
    %v853 = vpop.f32.mrf.mxu0
    %v854 = vadd.f32 0.0, %v853
    %v855 = vpop.f32.mrf.mxu0
    %856 = vdwg.mxu0
    %v857 = vmul.f32 %v795, %v350
    %v858 = vmul.f32 %v798, %v355
    %v859 = vmul.f32 %v803, %v360
    %v860 = vmul.f32 %v806, %v365
    %v861 = vmul.f32 %v811, %v370
    %v862 = vmul.f32 %v814, %v375
    %v863 = vmul.f32 %v819, %v380
    %v864 = vmul.f32 %v822, %v385
    %v865 = vmul.f32 %v827, %v390
    %v866 = vmul.f32 %v830, %v395
    %v867 = vmul.f32 %v835, %v400
    %v868 = vmul.f32 %v838, %v405
    %v869 = vmul.f32 %v843, %v410
    %v870 = vmul.f32 %v846, %v415
    %v871 = vmul.f32 %v851, %v420
    %v872 = vmul.f32 %v854, %v425
    %v873 = vpack.c.bf16 %v858, %v857
    %v874 = vpack.c.bf16 %v860, %v859
    %v875 = vpack.c.bf16 %v862, %v861
    %v876 = vpack.c.bf16 %v864, %v863
    %v877 = vpack.c.bf16 %v866, %v865
    %v878 = vpack.c.bf16 %v868, %v867
    %v879 = vpack.c.bf16 %v870, %v869
    %v880 = vpack.c.bf16 %v872, %v871
    %v897 = vunpack.c.l.b16 %v743
    %v898 = vunpack.c.l.b16 %v744
    %v899 = vunpack.c.l.b16 %v745
    %v900 = vunpack.c.l.b16 %v746
    %v901 = vunpack.c.l.b16 %v747
    %v902 = vunpack.c.l.b16 %v748
    %v903 = vunpack.c.l.b16 %v749
    %v904 = vunpack.c.l.b16 %v750
    %v905 = vunpack.c.l.b16 %v751
    %v906 = vunpack.c.l.b16 %v752
    %v907 = vunpack.c.l.b16 %v753
    %v908 = vunpack.c.l.b16 %v754
    %v909 = vunpack.c.l.b16 %v755
    %v910 = vunpack.c.l.b16 %v756
    %v911 = vunpack.c.l.b16 %v757
    %v912 = vunpack.c.l.b16 %v758
    %v913 = vpack.c.b16 %v898, %v897
    %v914 = vpack.c.b16 %v900, %v899
    %v915 = vpack.c.b16 %v902, %v901
    %v916 = vpack.c.b16 %v904, %v903
    %v917 = vpack.c.b16 %v906, %v905
    %v918 = vpack.c.b16 %v908, %v907
    %v919 = vpack.c.b16 %v910, %v909
    %v920 = vpack.c.b16 %v912, %v911
    %929 = vmatprep.subr.bf16.mxu0 0
    %930 = vmatpush1.bf16.msra.mxu0 %v920
    %931 = vmatprep.subr.bf16.mxu0 0
    %932 = vmatpush1.bf16.msra.mxu0 %v919
    %933 = vmatprep.subr.bf16.mxu0 0
    %934 = vmatpush1.bf16.msra.mxu0 %v918
    %935 = vmatprep.subr.bf16.mxu0 0
    %936 = vmatpush1.bf16.msra.mxu0 %v917
    %937 = vmatprep.subr.bf16.mxu0 0
    %938 = vmatpush1.bf16.msra.mxu0 %v916
    %939 = vmatprep.subr.bf16.mxu0 0
    %940 = vmatpush1.bf16.msra.mxu0 %v915
    %941 = vmatprep.subr.bf16.mxu0 0
    %942 = vmatpush1.bf16.msra.mxu0 %v914
    %943 = vmatprep.subr.bf16.mxu0 0
    %944 = vmatpush1.bf16.msra.mxu0 %v913
    %945 = vmatprep.subr.bf16.mxu0 0
    %946 = vmatpush2.bf16.msra.mxu0 0
    %947 = vmatprep.subr.bf16.mxu0 0
    %948 = vmatpush2.bf16.msra.mxu0 0
    %949 = vmatprep.subr.bf16.mxu0 0
    %950 = vmatpush2.bf16.msra.mxu0 0
    %951 = vmatprep.subr.bf16.mxu0 0
    %952 = vmatpush2.bf16.msra.mxu0 0
    %953 = vmatprep.subr.bf16.mxu0 0
    %954 = vmatpush2.bf16.msra.mxu0 0
    %955 = vmatprep.subr.bf16.mxu0 0
    %956 = vmatpush2.bf16.msra.mxu0 0
    %957 = vmatprep.subr.bf16.mxu0 0
    %958 = vmatpush2.bf16.msra.mxu0 0
    %959 = vmatprep.subr.bf16.mxu0 0
    %960 = vmatpush2.bf16.msra.mxu0 0
    %961 = vmatprep.mubr.bf16.mxu0 0
    %962 = vmatmul.mubr.bf16.gmra.mxu0 %v873
    %v963 = vpop.f32.mrf.mxu0
    %v964 = vadd.f32 0.0, %v963
    %v965 = vpop.f32.mrf.mxu0
    %v966 = vpop.f32.mrf.mxu0
    %v967 = vadd.f32 0.0, %v966
    %v968 = vpop.f32.mrf.mxu0
    %969 = vmatprep.mubr.bf16.mxu0 0
    %970 = vmatmul.mubr.bf16.gmra.mxu0 %v874
    %v971 = vpop.f32.mrf.mxu0
    %v972 = vadd.f32 0.0, %v971
    %v973 = vpop.f32.mrf.mxu0
    %v974 = vpop.f32.mrf.mxu0
    %v975 = vadd.f32 0.0, %v974
    %v976 = vpop.f32.mrf.mxu0
    %977 = vmatprep.mubr.bf16.mxu0 0
    %978 = vmatmul.mubr.bf16.gmra.mxu0 %v875
    %v979 = vpop.f32.mrf.mxu0
    %v980 = vadd.f32 0.0, %v979
    %v981 = vpop.f32.mrf.mxu0
    %v982 = vpop.f32.mrf.mxu0
    %v983 = vadd.f32 0.0, %v982
    %v984 = vpop.f32.mrf.mxu0
    %985 = vmatprep.mubr.bf16.mxu0 0
    %986 = vmatmul.mubr.bf16.gmra.mxu0 %v876
    %v987 = vpop.f32.mrf.mxu0
    %v988 = vadd.f32 0.0, %v987
    %v989 = vpop.f32.mrf.mxu0
    %v990 = vpop.f32.mrf.mxu0
    %v991 = vadd.f32 0.0, %v990
    %v992 = vpop.f32.mrf.mxu0
    %993 = vmatprep.mubr.bf16.mxu0 0
    %994 = vmatmul.mubr.bf16.gmra.mxu0 %v877
    %v995 = vpop.f32.mrf.mxu0
    %v996 = vadd.f32 0.0, %v995
    %v997 = vpop.f32.mrf.mxu0
    %v998 = vpop.f32.mrf.mxu0
    %v999 = vadd.f32 0.0, %v998
    %v1000 = vpop.f32.mrf.mxu0
    %1001 = vmatprep.mubr.bf16.mxu0 0
    %1002 = vmatmul.mubr.bf16.gmra.mxu0 %v878
    %v1003 = vpop.f32.mrf.mxu0
    %v1004 = vadd.f32 0.0, %v1003
    %v1005 = vpop.f32.mrf.mxu0
    %v1006 = vpop.f32.mrf.mxu0
    %v1007 = vadd.f32 0.0, %v1006
    %v1008 = vpop.f32.mrf.mxu0
    %1009 = vmatprep.mubr.bf16.mxu0 0
    %1010 = vmatmul.mubr.bf16.gmra.mxu0 %v879
    %v1011 = vpop.f32.mrf.mxu0
    %v1012 = vadd.f32 0.0, %v1011
    %v1013 = vpop.f32.mrf.mxu0
    %v1014 = vpop.f32.mrf.mxu0
    %v1015 = vadd.f32 0.0, %v1014
    %v1016 = vpop.f32.mrf.mxu0
    %1017 = vmatprep.mubr.bf16.mxu0 0
    %1018 = vmatmul.mubr.bf16.gmra.mxu0 %v880
    %v1019 = vpop.f32.mrf.mxu0
    %v1020 = vadd.f32 0.0, %v1019
    %v1021 = vpop.f32.mrf.mxu0
    %v1022 = vpop.f32.mrf.mxu0
    %v1023 = vadd.f32 0.0, %v1022
    %v1024 = vpop.f32.mrf.mxu0
    %1025 = vdwg.mxu0
    %v1026 = vpack.c.bf16 %v967, %v964
    %v1027 = vpack.c.bf16 %v975, %v972
    %v1028 = vpack.c.bf16 %v983, %v980
    %v1029 = vpack.c.bf16 %v991, %v988
    %v1030 = vpack.c.bf16 %v999, %v996
    %v1031 = vpack.c.bf16 %v1007, %v1004
    %v1032 = vpack.c.bf16 %v1015, %v1012
    %v1033 = vpack.c.bf16 %v1023, %v1020
    %1034 = vmatprep.subr.bf16.mxu0 0
    %1035 = vmatpush1.bf16.msra.mxu0 %v1033
    %1036 = vmatprep.subr.bf16.mxu0 0
    %1037 = vmatpush1.bf16.msra.mxu0 %v1032
    %1038 = vmatprep.subr.bf16.mxu0 0
    %1039 = vmatpush1.bf16.msra.mxu0 %v1031
    %1040 = vmatprep.subr.bf16.mxu0 0
    %1041 = vmatpush1.bf16.msra.mxu0 %v1030
    %1042 = vmatprep.subr.bf16.mxu0 0
    %1043 = vmatpush1.bf16.msra.mxu0 %v1029
    %1044 = vmatprep.subr.bf16.mxu0 0
    %1045 = vmatpush1.bf16.msra.mxu0 %v1028
    %1046 = vmatprep.subr.bf16.mxu0 0
    %1047 = vmatpush1.bf16.msra.mxu0 %v1027
    %1048 = vmatprep.subr.bf16.mxu0 0
    %1049 = vmatpush1.bf16.msra.mxu0 %v1026
    %1050 = vmatprep.subr.bf16.mxu0 0
    %1051 = vmatpush2.bf16.msra.mxu0 0
    %1052 = vmatprep.subr.bf16.mxu0 0
    %1053 = vmatpush2.bf16.msra.mxu0 0
    %1054 = vmatprep.subr.bf16.mxu0 0
    %1055 = vmatpush2.bf16.msra.mxu0 0
    %1056 = vmatprep.subr.bf16.mxu0 0
    %1057 = vmatpush2.bf16.msra.mxu0 0
    %1058 = vmatprep.subr.bf16.mxu0 0
    %1059 = vmatpush2.bf16.msra.mxu0 0
    %1060 = vmatprep.subr.bf16.mxu0 0
    %1061 = vmatpush2.bf16.msra.mxu0 0
    %1062 = vmatprep.subr.bf16.mxu0 0
    %1063 = vmatpush2.bf16.msra.mxu0 0
    %1064 = vmatprep.subr.bf16.mxu0 0
    %1065 = vmatpush2.bf16.msra.mxu0 0
    %1066 = vmatprep.mubr.bf16.mxu0 0
    %1067 = vmatmul.mubr.bf16.gmra.mxu0 %v177
    %v1068 = vpop.f32.mrf.mxu0
    %v1069 = vadd.f32 0.0, %v1068
    %v1070 = vpop.f32.mrf.mxu0
    %v1071 = vpop.f32.mrf.mxu0
    %v1072 = vadd.f32 0.0, %v1071
    %v1073 = vpop.f32.mrf.mxu0
    %1074 = vmatprep.mubr.bf16.mxu0 0
    %1075 = vmatmul.mubr.bf16.gmra.mxu0 %v178
    %v1076 = vpop.f32.mrf.mxu0
    %v1077 = vadd.f32 0.0, %v1076
    %v1078 = vpop.f32.mrf.mxu0
    %v1079 = vpop.f32.mrf.mxu0
    %v1080 = vadd.f32 0.0, %v1079
    %v1081 = vpop.f32.mrf.mxu0
    %1082 = vmatprep.mubr.bf16.mxu0 0
    %1083 = vmatmul.mubr.bf16.gmra.mxu0 %v179
    %v1084 = vpop.f32.mrf.mxu0
    %v1085 = vadd.f32 0.0, %v1084
    %v1086 = vpop.f32.mrf.mxu0
    %v1087 = vpop.f32.mrf.mxu0
    %v1088 = vadd.f32 0.0, %v1087
    %v1089 = vpop.f32.mrf.mxu0
    %1090 = vmatprep.mubr.bf16.mxu0 0
    %1091 = vmatmul.mubr.bf16.gmra.mxu0 %v180
    %v1092 = vpop.f32.mrf.mxu0
    %v1093 = vadd.f32 0.0, %v1092
    %v1094 = vpop.f32.mrf.mxu0
    %v1095 = vpop.f32.mrf.mxu0
    %v1096 = vadd.f32 0.0, %v1095
    %v1097 = vpop.f32.mrf.mxu0
    %1098 = vdwg.mxu0
    %v1099 = vmul.f32 %v1069, %v672
    %v1100 = vmul.f32 %v1072, %v677
    %v1101 = vmul.f32 %v1077, %v682
    %v1102 = vmul.f32 %v1080, %v687
    %v1103 = vmul.f32 %v1085, %v692
    %v1104 = vmul.f32 %v1088, %v697
    %v1105 = vmul.f32 %v1093, %v702
    %v1106 = vmul.f32 %v1096, %v707
    %v1108 = vlaneseq
    %v1109 = vshrl.u32 %v1108, 7
    %v1110 = vsub.s32 0, %v1109
    %v1111 = vrot.slane %v759, %v1110
    %v1113 = vadd.f32 %v1099, %v1111
    %v1114 = vadd.f32 %v1100, %v1111
    %v1115 = vadd.f32 %v1101, %v1111
    %v1116 = vadd.f32 %v1102, %v1111
    %v1117 = vadd.f32 %v1103, %v1111
    %v1118 = vadd.f32 %v1104, %v1111
    %v1119 = vadd.f32 %v1105, %v1111
    %v1120 = vadd.f32 %v1106, %v1111
    %v1121 = vmax.f32 %v1113, 0.0
    %v1122 = vmax.f32 %v1114, 0.0
    %v1123 = vmax.f32 %v1115, 0.0
    %v1124 = vmax.f32 %v1116, 0.0
    %v1125 = vmax.f32 %v1117, 0.0
    %v1126 = vmax.f32 %v1118, 0.0
    %v1127 = vmax.f32 %v1119, 0.0
    %v1128 = vmax.f32 %v1120, 0.0
    %v1129 = vpack.c.bf16 %v1122, %v1121
    %v1130 = vpack.c.bf16 %v1124, %v1123
    %v1131 = vpack.c.bf16 %v1126, %v1125
    %v1132 = vpack.c.bf16 %v1128, %v1127
    %v1133 = vld [vmem:[%s8] sm:$0xf]
    %v1134 = vld [vmem:[%s8 + $0x4] sm:$0xf]
    %v1135 = vld [vmem:[%s8 + $0x8] sm:$0xf]
    %v1136 = vld [vmem:[%s8 + $0xc] sm:$0xf]
    %v1137 = vld [vmem:[%s8 + $0x10] sm:$0xf]
    %v1138 = vld [vmem:[%s8 + $0x14] sm:$0xf]
    %v1139 = vld [vmem:[%s8 + $0x18] sm:$0xf]
    %v1140 = vld [vmem:[%s8 + $0x1c] sm:$0xf]
    %v1141 = vld [vmem:[%s8 + $0x20] sm:$0xf]
    %v1142 = vld [vmem:[%s8 + $0x24] sm:$0xf]
    %v1143 = vld [vmem:[%s8 + $0x28] sm:$0xf]
    %v1144 = vld [vmem:[%s8 + $0x2c] sm:$0xf]
    %v1145 = vld [vmem:[%s8 + $0x30] sm:$0xf]
    %v1146 = vld [vmem:[%s8 + $0x34] sm:$0xf]
    %v1147 = vld [vmem:[%s8 + $0x38] sm:$0xf]
    %v1148 = vld [vmem:[%s8 + $0x3c] sm:$0xf]
    %v1149 = vld [vmem:[%s9] sm:$0x1]
    %1150 = vmatprep.subr.bf16.mxu0 0
    %1151 = vmatpush1.bf16.msra.mxu0 0
    %1152 = vmatprep.subr.bf16.mxu0 0
    %1153 = vmatpush1.bf16.msra.mxu0 0
    %1154 = vmatprep.subr.bf16.mxu0 0
    %1155 = vmatpush1.bf16.msra.mxu0 0
    %1156 = vmatprep.subr.bf16.mxu0 0
    %1157 = vmatpush1.bf16.msra.mxu0 0
    %1158 = vmatprep.subr.bf16.mxu0 0
    %1159 = vmatpush1.bf16.msra.mxu0 %v1132
    %1160 = vmatprep.subr.bf16.mxu0 0
    %1161 = vmatpush1.bf16.msra.mxu0 %v1131
    %1162 = vmatprep.subr.bf16.mxu0 0
    %1163 = vmatpush1.bf16.msra.mxu0 %v1130
    %1164 = vmatprep.subr.bf16.mxu0 0
    %1165 = vmatpush1.bf16.msra.mxu0 %v1129
    %1166 = vmatprep.subr.bf16.mxu0 0
    %1167 = vmatpush2.bf16.msra.mxu0 0
    %1168 = vmatprep.subr.bf16.mxu0 0
    %1169 = vmatpush2.bf16.msra.mxu0 0
    %1170 = vmatprep.subr.bf16.mxu0 0
    %1171 = vmatpush2.bf16.msra.mxu0 0
    %1172 = vmatprep.subr.bf16.mxu0 0
    %1173 = vmatpush2.bf16.msra.mxu0 0
    %1174 = vmatprep.subr.bf16.mxu0 0
    %1175 = vmatpush2.bf16.msra.mxu0 0
    %1176 = vmatprep.subr.bf16.mxu0 0
    %1177 = vmatpush2.bf16.msra.mxu0 0
    %1178 = vmatprep.subr.bf16.mxu0 0
    %1179 = vmatpush2.bf16.msra.mxu0 0
    %1180 = vmatprep.subr.bf16.mxu0 0
    %1181 = vmatpush2.bf16.msra.mxu0 0
    %1182 = vmatprep.mubr.bf16.mxu0 0
    %1183 = vmatmul.mubr.bf16.gmra.mxu0 %v227
    %v1184 = vpop.f32.mrf.mxu0
    %v1185 = vadd.f32 0.0, %v1184
    %v1186 = vpop.f32.mrf.mxu0
    %v1187 = vpop.f32.mrf.mxu0
    %v1188 = vadd.f32 0.0, %v1187
    %v1189 = vpop.f32.mrf.mxu0
    %1190 = vmatprep.mubr.bf16.mxu0 0
    %1191 = vmatmul.mubr.bf16.gmra.mxu0 %v230
    %v1192 = vpop.f32.mrf.mxu0
    %v1193 = vadd.f32 0.0, %v1192
    %v1194 = vpop.f32.mrf.mxu0
    %v1195 = vpop.f32.mrf.mxu0
    %v1196 = vadd.f32 0.0, %v1195
    %v1197 = vpop.f32.mrf.mxu0
    %1198 = vmatprep.mubr.bf16.mxu0 0
    %1199 = vmatmul.mubr.bf16.gmra.mxu0 %v233
    %v1200 = vpop.f32.mrf.mxu0
    %v1201 = vadd.f32 0.0, %v1200
    %v1202 = vpop.f32.mrf.mxu0
    %v1203 = vpop.f32.mrf.mxu0
    %v1204 = vadd.f32 0.0, %v1203
    %v1205 = vpop.f32.mrf.mxu0
    %1206 = vmatprep.mubr.bf16.mxu0 0
    %1207 = vmatmul.mubr.bf16.gmra.mxu0 %v236
    %v1208 = vpop.f32.mrf.mxu0
    %v1209 = vadd.f32 0.0, %v1208
    %v1210 = vpop.f32.mrf.mxu0
    %v1211 = vpop.f32.mrf.mxu0
    %v1212 = vadd.f32 0.0, %v1211
    %v1213 = vpop.f32.mrf.mxu0
    %1214 = vmatprep.mubr.bf16.mxu0 0
    %1215 = vmatmul.mubr.bf16.gmra.mxu0 %v239
    %v1216 = vpop.f32.mrf.mxu0
    %v1217 = vadd.f32 0.0, %v1216
    %v1218 = vpop.f32.mrf.mxu0
    %v1219 = vpop.f32.mrf.mxu0
    %v1220 = vadd.f32 0.0, %v1219
    %v1221 = vpop.f32.mrf.mxu0
    %1222 = vmatprep.mubr.bf16.mxu0 0
    %1223 = vmatmul.mubr.bf16.gmra.mxu0 %v242
    %v1224 = vpop.f32.mrf.mxu0
    %v1225 = vadd.f32 0.0, %v1224
    %v1226 = vpop.f32.mrf.mxu0
    %v1227 = vpop.f32.mrf.mxu0
    %v1228 = vadd.f32 0.0, %v1227
    %v1229 = vpop.f32.mrf.mxu0
    %1230 = vmatprep.mubr.bf16.mxu0 0
    %1231 = vmatmul.mubr.bf16.gmra.mxu0 %v245
    %v1232 = vpop.f32.mrf.mxu0
    %v1233 = vadd.f32 0.0, %v1232
    %v1234 = vpop.f32.mrf.mxu0
    %v1235 = vpop.f32.mrf.mxu0
    %v1236 = vadd.f32 0.0, %v1235
    %v1237 = vpop.f32.mrf.mxu0
    %1238 = vmatprep.mubr.bf16.mxu0 0
    %1239 = vmatmul.mubr.bf16.gmra.mxu0 %v248
    %v1240 = vpop.f32.mrf.mxu0
    %v1241 = vadd.f32 0.0, %v1240
    %v1242 = vpop.f32.mrf.mxu0
    %v1243 = vpop.f32.mrf.mxu0
    %v1244 = vadd.f32 0.0, %v1243
    %v1245 = vpop.f32.mrf.mxu0
    %1246 = vdwg.mxu0
    %v1247 = vmul.f32 %v1185, %v350
    %v1248 = vmul.f32 %v1188, %v355
    %v1249 = vmul.f32 %v1193, %v360
    %v1250 = vmul.f32 %v1196, %v365
    %v1251 = vmul.f32 %v1201, %v370
    %v1252 = vmul.f32 %v1204, %v375
    %v1253 = vmul.f32 %v1209, %v380
    %v1254 = vmul.f32 %v1212, %v385
    %v1255 = vmul.f32 %v1217, %v390
    %v1256 = vmul.f32 %v1220, %v395
    %v1257 = vmul.f32 %v1225, %v400
    %v1258 = vmul.f32 %v1228, %v405
    %v1259 = vmul.f32 %v1233, %v410
    %v1260 = vmul.f32 %v1236, %v415
    %v1261 = vmul.f32 %v1241, %v420
    %v1262 = vmul.f32 %v1244, %v425
    %v1263 = vpack.c.bf16 %v1248, %v1247
    %v1264 = vpack.c.bf16 %v1250, %v1249
    %v1265 = vpack.c.bf16 %v1252, %v1251
    %v1266 = vpack.c.bf16 %v1254, %v1253
    %v1267 = vpack.c.bf16 %v1256, %v1255
    %v1268 = vpack.c.bf16 %v1258, %v1257
    %v1269 = vpack.c.bf16 %v1260, %v1259
    %v1270 = vpack.c.bf16 %v1262, %v1261
    %v1287 = vunpack.c.l.b16 %v1133
    %v1288 = vunpack.c.l.b16 %v1134
    %v1289 = vunpack.c.l.b16 %v1135
    %v1290 = vunpack.c.l.b16 %v1136
    %v1291 = vunpack.c.l.b16 %v1137
    %v1292 = vunpack.c.l.b16 %v1138
    %v1293 = vunpack.c.l.b16 %v1139
    %v1294 = vunpack.c.l.b16 %v1140
    %v1295 = vunpack.c.l.b16 %v1141
    %v1296 = vunpack.c.l.b16 %v1142
    %v1297 = vunpack.c.l.b16 %v1143
    %v1298 = vunpack.c.l.b16 %v1144
    %v1299 = vunpack.c.l.b16 %v1145
    %v1300 = vunpack.c.l.b16 %v1146
    %v1301 = vunpack.c.l.b16 %v1147
    %v1302 = vunpack.c.l.b16 %v1148
    %v1303 = vpack.c.b16 %v1288, %v1287
    %v1304 = vpack.c.b16 %v1290, %v1289
    %v1305 = vpack.c.b16 %v1292, %v1291
    %v1306 = vpack.c.b16 %v1294, %v1293
    %v1307 = vpack.c.b16 %v1296, %v1295
    %v1308 = vpack.c.b16 %v1298, %v1297
    %v1309 = vpack.c.b16 %v1300, %v1299
    %v1310 = vpack.c.b16 %v1302, %v1301
    %1319 = vmatprep.subr.bf16.mxu0 0
    %1320 = vmatpush1.bf16.msra.mxu0 %v1310
    %1321 = vmatprep.subr.bf16.mxu0 0
    %1322 = vmatpush1.bf16.msra.mxu0 %v1309
    %1323 = vmatprep.subr.bf16.mxu0 0
    %1324 = vmatpush1.bf16.msra.mxu0 %v1308
    %1325 = vmatprep.subr.bf16.mxu0 0
    %1326 = vmatpush1.bf16.msra.mxu0 %v1307
    %1327 = vmatprep.subr.bf16.mxu0 0
    %1328 = vmatpush1.bf16.msra.mxu0 %v1306
    %1329 = vmatprep.subr.bf16.mxu0 0
    %1330 = vmatpush1.bf16.msra.mxu0 %v1305
    %1331 = vmatprep.subr.bf16.mxu0 0
    %1332 = vmatpush1.bf16.msra.mxu0 %v1304
    %1333 = vmatprep.subr.bf16.mxu0 0
    %1334 = vmatpush1.bf16.msra.mxu0 %v1303
    %1335 = vmatprep.subr.bf16.mxu0 0
    %1336 = vmatpush2.bf16.msra.mxu0 0
    %1337 = vmatprep.subr.bf16.mxu0 0
    %1338 = vmatpush2.bf16.msra.mxu0 0
    %1339 = vmatprep.subr.bf16.mxu0 0
    %1340 = vmatpush2.bf16.msra.mxu0 0
    %1341 = vmatprep.subr.bf16.mxu0 0
    %1342 = vmatpush2.bf16.msra.mxu0 0
    %1343 = vmatprep.subr.bf16.mxu0 0
    %1344 = vmatpush2.bf16.msra.mxu0 0
    %1345 = vmatprep.subr.bf16.mxu0 0
    %1346 = vmatpush2.bf16.msra.mxu0 0
    %1347 = vmatprep.subr.bf16.mxu0 0
    %1348 = vmatpush2.bf16.msra.mxu0 0
    %1349 = vmatprep.subr.bf16.mxu0 0
    %1350 = vmatpush2.bf16.msra.mxu0 0
    %1351 = vmatprep.mubr.bf16.mxu0 0
    %1352 = vmatmul.mubr.bf16.gmra.mxu0 %v1263
    %v1353 = vpop.f32.mrf.mxu0
    %v1354 = vadd.f32 0.0, %v1353
    %v1355 = vpop.f32.mrf.mxu0
    %v1356 = vpop.f32.mrf.mxu0
    %v1357 = vadd.f32 0.0, %v1356
    %v1358 = vpop.f32.mrf.mxu0
    %1359 = vmatprep.mubr.bf16.mxu0 0
    %1360 = vmatmul.mubr.bf16.gmra.mxu0 %v1264
    %v1361 = vpop.f32.mrf.mxu0
    %v1362 = vadd.f32 0.0, %v1361
    %v1363 = vpop.f32.mrf.mxu0
    %v1364 = vpop.f32.mrf.mxu0
    %v1365 = vadd.f32 0.0, %v1364
    %v1366 = vpop.f32.mrf.mxu0
    %1367 = vmatprep.mubr.bf16.mxu0 0
    %1368 = vmatmul.mubr.bf16.gmra.mxu0 %v1265
    %v1369 = vpop.f32.mrf.mxu0
    %v1370 = vadd.f32 0.0, %v1369
    %v1371 = vpop.f32.mrf.mxu0
    %v1372 = vpop.f32.mrf.mxu0
    %v1373 = vadd.f32 0.0, %v1372
    %v1374 = vpop.f32.mrf.mxu0
    %1375 = vmatprep.mubr.bf16.mxu0 0
    %1376 = vmatmul.mubr.bf16.gmra.mxu0 %v1266
    %v1377 = vpop.f32.mrf.mxu0
    %v1378 = vadd.f32 0.0, %v1377
    %v1379 = vpop.f32.mrf.mxu0
    %v1380 = vpop.f32.mrf.mxu0
    %v1381 = vadd.f32 0.0, %v1380
    %v1382 = vpop.f32.mrf.mxu0
    %1383 = vmatprep.mubr.bf16.mxu0 0
    %1384 = vmatmul.mubr.bf16.gmra.mxu0 %v1267
    %v1385 = vpop.f32.mrf.mxu0
    %v1386 = vadd.f32 0.0, %v1385
    %v1387 = vpop.f32.mrf.mxu0
    %v1388 = vpop.f32.mrf.mxu0
    %v1389 = vadd.f32 0.0, %v1388
    %v1390 = vpop.f32.mrf.mxu0
    %1391 = vmatprep.mubr.bf16.mxu0 0
    %1392 = vmatmul.mubr.bf16.gmra.mxu0 %v1268
    %v1393 = vpop.f32.mrf.mxu0
    %v1394 = vadd.f32 0.0, %v1393
    %v1395 = vpop.f32.mrf.mxu0
    %v1396 = vpop.f32.mrf.mxu0
    %v1397 = vadd.f32 0.0, %v1396
    %v1398 = vpop.f32.mrf.mxu0
    %1399 = vmatprep.mubr.bf16.mxu0 0
    %1400 = vmatmul.mubr.bf16.gmra.mxu0 %v1269
    %v1401 = vpop.f32.mrf.mxu0
    %v1402 = vadd.f32 0.0, %v1401
    %v1403 = vpop.f32.mrf.mxu0
    %v1404 = vpop.f32.mrf.mxu0
    %v1405 = vadd.f32 0.0, %v1404
    %v1406 = vpop.f32.mrf.mxu0
    %1407 = vmatprep.mubr.bf16.mxu0 0
    %1408 = vmatmul.mubr.bf16.gmra.mxu0 %v1270
    %v1409 = vpop.f32.mrf.mxu0
    %v1410 = vadd.f32 0.0, %v1409
    %v1411 = vpop.f32.mrf.mxu0
    %v1412 = vpop.f32.mrf.mxu0
    %v1413 = vadd.f32 0.0, %v1412
    %v1414 = vpop.f32.mrf.mxu0
    %1415 = vdwg.mxu0
    %v1416 = vpack.c.bf16 %v1357, %v1354
    %v1417 = vpack.c.bf16 %v1365, %v1362
    %v1418 = vpack.c.bf16 %v1373, %v1370
    %v1419 = vpack.c.bf16 %v1381, %v1378
    %v1420 = vpack.c.bf16 %v1389, %v1386
    %v1421 = vpack.c.bf16 %v1397, %v1394
    %v1422 = vpack.c.bf16 %v1405, %v1402
    %v1423 = vpack.c.bf16 %v1413, %v1410
    %1424 = vmatprep.subr.bf16.mxu0 0
    %1425 = vmatpush1.bf16.msra.mxu0 %v1423
    %1426 = vmatprep.subr.bf16.mxu0 0
    %1427 = vmatpush1.bf16.msra.mxu0 %v1422
    %1428 = vmatprep.subr.bf16.mxu0 0
    %1429 = vmatpush1.bf16.msra.mxu0 %v1421
    %1430 = vmatprep.subr.bf16.mxu0 0
    %1431 = vmatpush1.bf16.msra.mxu0 %v1420
    %1432 = vmatprep.subr.bf16.mxu0 0
    %1433 = vmatpush1.bf16.msra.mxu0 %v1419
    %1434 = vmatprep.subr.bf16.mxu0 0
    %1435 = vmatpush1.bf16.msra.mxu0 %v1418
    %1436 = vmatprep.subr.bf16.mxu0 0
    %1437 = vmatpush1.bf16.msra.mxu0 %v1417
    %1438 = vmatprep.subr.bf16.mxu0 0
    %1439 = vmatpush1.bf16.msra.mxu0 %v1416
    %1440 = vmatprep.subr.bf16.mxu0 0
    %1441 = vmatpush2.bf16.msra.mxu0 0
    %1442 = vmatprep.subr.bf16.mxu0 0
    %1443 = vmatpush2.bf16.msra.mxu0 0
    %1444 = vmatprep.subr.bf16.mxu0 0
    %1445 = vmatpush2.bf16.msra.mxu0 0
    %1446 = vmatprep.subr.bf16.mxu0 0
    %1447 = vmatpush2.bf16.msra.mxu0 0
    %1448 = vmatprep.subr.bf16.mxu0 0
    %1449 = vmatpush2.bf16.msra.mxu0 0
    %1450 = vmatprep.subr.bf16.mxu0 0
    %1451 = vmatpush2.bf16.msra.mxu0 0
    %1452 = vmatprep.subr.bf16.mxu0 0
    %1453 = vmatpush2.bf16.msra.mxu0 0
    %1454 = vmatprep.subr.bf16.mxu0 0
    %1455 = vmatpush2.bf16.msra.mxu0 0
    %1456 = vmatprep.mubr.bf16.mxu0 0
    %1457 = vmatmul.mubr.bf16.gmra.mxu0 %v177
    %v1458 = vpop.f32.mrf.mxu0
    %v1459 = vadd.f32 0.0, %v1458
    %v1460 = vpop.f32.mrf.mxu0
    %v1461 = vpop.f32.mrf.mxu0
    %v1462 = vadd.f32 0.0, %v1461
    %v1463 = vpop.f32.mrf.mxu0
    %1464 = vmatprep.mubr.bf16.mxu0 0
    %1465 = vmatmul.mubr.bf16.gmra.mxu0 %v178
    %v1466 = vpop.f32.mrf.mxu0
    %v1467 = vadd.f32 0.0, %v1466
    %v1468 = vpop.f32.mrf.mxu0
    %v1469 = vpop.f32.mrf.mxu0
    %v1470 = vadd.f32 0.0, %v1469
    %v1471 = vpop.f32.mrf.mxu0
    %1472 = vmatprep.mubr.bf16.mxu0 0
    %1473 = vmatmul.mubr.bf16.gmra.mxu0 %v179
    %v1474 = vpop.f32.mrf.mxu0
    %v1475 = vadd.f32 0.0, %v1474
    %v1476 = vpop.f32.mrf.mxu0
    %v1477 = vpop.f32.mrf.mxu0
    %v1478 = vadd.f32 0.0, %v1477
    %v1479 = vpop.f32.mrf.mxu0
    %1480 = vmatprep.mubr.bf16.mxu0 0
    %1481 = vmatmul.mubr.bf16.gmra.mxu0 %v180
    %v1482 = vpop.f32.mrf.mxu0
    %v1483 = vadd.f32 0.0, %v1482
    %v1484 = vpop.f32.mrf.mxu0
    %v1485 = vpop.f32.mrf.mxu0
    %v1486 = vadd.f32 0.0, %v1485
    %v1487 = vpop.f32.mrf.mxu0
    %1488 = vdwg.mxu0
    %v1489 = vmul.f32 %v1459, %v672
    %v1490 = vmul.f32 %v1462, %v677
    %v1491 = vmul.f32 %v1467, %v682
    %v1492 = vmul.f32 %v1470, %v687
    %v1493 = vmul.f32 %v1475, %v692
    %v1494 = vmul.f32 %v1478, %v697
    %v1495 = vmul.f32 %v1483, %v702
    %v1496 = vmul.f32 %v1486, %v707
    %v1498 = vlaneseq
    %v1499 = vshrl.u32 %v1498, 7
    %v1500 = vsub.s32 0, %v1499
    %v1501 = vrot.slane %v1149, %v1500
    %v1503 = vadd.f32 %v1489, %v1501
    %v1504 = vadd.f32 %v1490, %v1501
    %v1505 = vadd.f32 %v1491, %v1501
    %v1506 = vadd.f32 %v1492, %v1501
    %v1507 = vadd.f32 %v1493, %v1501
    %v1508 = vadd.f32 %v1494, %v1501
    %v1509 = vadd.f32 %v1495, %v1501
    %v1510 = vadd.f32 %v1496, %v1501
    %v1511 = vmax.f32 %v1503, 0.0
    %v1512 = vmax.f32 %v1504, 0.0
    %v1513 = vmax.f32 %v1505, 0.0
    %v1514 = vmax.f32 %v1506, 0.0
    %v1515 = vmax.f32 %v1507, 0.0
    %v1516 = vmax.f32 %v1508, 0.0
    %v1517 = vmax.f32 %v1509, 0.0
    %v1518 = vmax.f32 %v1510, 0.0
    %v1519 = vpack.c.bf16 %v1512, %v1511
    %v1520 = vpack.c.bf16 %v1514, %v1513
    %v1521 = vpack.c.bf16 %v1516, %v1515
    %v1522 = vpack.c.bf16 %v1518, %v1517
    %v1523 = vld [vmem:[#allocation7] sm:$0xf]
    %v1524 = vld [vmem:[#allocation7 + $0x4] sm:$0xf]
    %v1525 = vld [vmem:[#allocation7 + $0x8] sm:$0xf]
    %v1526 = vld [vmem:[#allocation7 + $0xc] sm:$0xf]
    %v1527 = vld [vmem:[#allocation7 + $0x10] sm:$0xf]
    %v1528 = vld [vmem:[#allocation7 + $0x14] sm:$0xf]
    %v1529 = vld [vmem:[#allocation7 + $0x18] sm:$0xf]
    %v1530 = vld [vmem:[#allocation7 + $0x1c] sm:$0xf]
    %v1531 = vld [vmem:[#allocation7 + $0x20] sm:$0xf]
    %v1532 = vld [vmem:[#allocation7 + $0x24] sm:$0xf]
    %v1533 = vld [vmem:[#allocation7 + $0x28] sm:$0xf]
    %v1534 = vld [vmem:[#allocation7 + $0x2c] sm:$0xf]
    %v1535 = vld [vmem:[#allocation7 + $0x30] sm:$0xf]
    %v1536 = vld [vmem:[#allocation7 + $0x34] sm:$0xf]
    %v1537 = vld [vmem:[#allocation7 + $0x38] sm:$0xf]
    %v1538 = vld [vmem:[#allocation7 + $0x3c] sm:$0xf]
    %v1539 = vld [vmem:[%s11] sm:$0x1]
    %v1541 = vlaneseq
    %v1542 = vshrl.u32 %v1541, 7
    %v1543 = vsub.s32 0, %v1542
    %v1544 = vrot.slane %v1539, %v1543
    %v1562 = vunpack.c.l.b16 %v1523
    %v1563 = vunpack.c.l.b16 %v1524
    %v1564 = vunpack.c.l.b16 %v1525
    %v1565 = vunpack.c.l.b16 %v1526
    %v1566 = vunpack.c.l.b16 %v1527
    %v1567 = vunpack.c.l.b16 %v1528
    %v1568 = vunpack.c.l.b16 %v1529
    %v1569 = vunpack.c.l.b16 %v1530
    %v1570 = vunpack.c.l.b16 %v1531
    %v1571 = vunpack.c.l.b16 %v1532
    %v1572 = vunpack.c.l.b16 %v1533
    %v1573 = vunpack.c.l.b16 %v1534
    %v1574 = vunpack.c.l.b16 %v1535
    %v1575 = vunpack.c.l.b16 %v1536
    %v1576 = vunpack.c.l.b16 %v1537
    %v1577 = vunpack.c.l.b16 %v1538
    %v1578 = vpack.c.b16 %v1563, %v1562
    %v1579 = vpack.c.b16 %v1565, %v1564
    %v1580 = vpack.c.b16 %v1567, %v1566
    %v1581 = vpack.c.b16 %v1569, %v1568
    %v1582 = vpack.c.b16 %v1571, %v1570
    %v1583 = vpack.c.b16 %v1573, %v1572
    %v1584 = vpack.c.b16 %v1575, %v1574
    %v1585 = vpack.c.b16 %v1577, %v1576
    %1594 = vmatprep.subr.bf16.mxu0 0
    %1595 = vmatpush1.bf16.msra.mxu0 %v1585
    %1596 = vmatprep.subr.bf16.mxu0 0
    %1597 = vmatpush1.bf16.msra.mxu0 %v1584
    %1598 = vmatprep.subr.bf16.mxu0 0
    %1599 = vmatpush1.bf16.msra.mxu0 %v1583
    %1600 = vmatprep.subr.bf16.mxu0 0
    %1601 = vmatpush1.bf16.msra.mxu0 %v1582
    %1602 = vmatprep.subr.bf16.mxu0 0
    %1603 = vmatpush1.bf16.msra.mxu0 %v1581
    %1604 = vmatprep.subr.bf16.mxu0 0
    %1605 = vmatpush1.bf16.msra.mxu0 %v1580
    %1606 = vmatprep.subr.bf16.mxu0 0
    %1607 = vmatpush1.bf16.msra.mxu0 %v1579
    %1608 = vmatprep.subr.bf16.mxu0 0
    %1609 = vmatpush1.bf16.msra.mxu0 %v1578
    %1610 = vmatprep.subr.bf16.mxu0 0
    %1611 = vmatpush2.bf16.msra.mxu0 0
    %1612 = vmatprep.subr.bf16.mxu0 0
    %1613 = vmatpush2.bf16.msra.mxu0 0
    %1614 = vmatprep.subr.bf16.mxu0 0
    %1615 = vmatpush2.bf16.msra.mxu0 0
    %1616 = vmatprep.subr.bf16.mxu0 0
    %1617 = vmatpush2.bf16.msra.mxu0 0
    %1618 = vmatprep.subr.bf16.mxu0 0
    %1619 = vmatpush2.bf16.msra.mxu0 0
    %1620 = vmatprep.subr.bf16.mxu0 0
    %1621 = vmatpush2.bf16.msra.mxu0 0
    %1622 = vmatprep.subr.bf16.mxu0 0
    %1623 = vmatpush2.bf16.msra.mxu0 0
    %1624 = vmatprep.subr.bf16.mxu0 0
    %1625 = vmatpush2.bf16.msra.mxu0 0
    %1626 = vmatprep.mubr.bf16.mxu0 0
    %1627 = vmatmul.mubr.bf16.gmra.mxu0 %v1519
    %v1628 = vpop.f32.mrf.mxu0
    %v1629 = vadd.f32 %v1544, %v1628
    %v1630 = vpop.f32.mrf.mxu0
    %v1631 = vpop.f32.mrf.mxu0
    %v1632 = vadd.f32 %v1544, %v1631
    %v1633 = vpop.f32.mrf.mxu0
    %1634 = vmatprep.mubr.bf16.mxu0 0
    %1635 = vmatmul.mubr.bf16.gmra.mxu0 %v1520
    %v1636 = vpop.f32.mrf.mxu0
    %v1637 = vadd.f32 %v1544, %v1636
    %v1638 = vpop.f32.mrf.mxu0
    %v1639 = vpop.f32.mrf.mxu0
    %v1640 = vadd.f32 %v1544, %v1639
    %v1641 = vpop.f32.mrf.mxu0
    %1642 = vmatprep.mubr.bf16.mxu0 0
    %1643 = vmatmul.mubr.bf16.gmra.mxu0 %v1521
    %v1644 = vpop.f32.mrf.mxu0
    %v1645 = vadd.f32 %v1544, %v1644
    %v1646 = vpop.f32.mrf.mxu0
    %v1647 = vpop.f32.mrf.mxu0
    %v1648 = vadd.f32 %v1544, %v1647
    %v1649 = vpop.f32.mrf.mxu0
    %1650 = vmatprep.mubr.bf16.mxu0 0
    %1651 = vmatmul.mubr.bf16.gmra.mxu0 %v1522
    %v1652 = vpop.f32.mrf.mxu0
    %v1653 = vadd.f32 %v1544, %v1652
    %v1654 = vpop.f32.mrf.mxu0
    %v1655 = vpop.f32.mrf.mxu0
    %v1656 = vadd.f32 %v1544, %v1655
    %v1657 = vpop.f32.mrf.mxu0
    %1658 = vdwg.mxu0
    %v1659 = vmax.f32 %v1629, 0.0
    %v1660 = vmax.f32 %v1632, 0.0
    %v1661 = vmax.f32 %v1637, 0.0
    %v1662 = vmax.f32 %v1640, 0.0
    %v1663 = vmax.f32 %v1645, 0.0
    %v1664 = vmax.f32 %v1648, 0.0
    %v1665 = vmax.f32 %v1653, 0.0
    %v1666 = vmax.f32 %v1656, 0.0
    %v1667 = vpack.c.bf16 %v1660, %v1659
    %v1668 = vpack.c.bf16 %v1662, %v1661
    %v1669 = vpack.c.bf16 %v1664, %v1663
    %v1670 = vpack.c.bf16 %v1666, %v1665
    %v1671 = vld [vmem:[#allocation8] sm:$0xf]
    %v1672 = vld [vmem:[#allocation8 + $0x4] sm:$0xf]
    %v1673 = vld [vmem:[#allocation8 + $0x8] sm:$0xf]
    %v1674 = vld [vmem:[#allocation8 + $0xc] sm:$0xf]
    %v1675 = vld [vmem:[#allocation8 + $0x10] sm:$0xf]
    %v1676 = vld [vmem:[#allocation8 + $0x14] sm:$0xf]
    %v1677 = vld [vmem:[#allocation8 + $0x18] sm:$0xf]
    %v1678 = vld [vmem:[#allocation8 + $0x1c] sm:$0xf]
    %v1679 = vld [vmem:[#allocation8 + $0x20] sm:$0xf]
    %v1680 = vld [vmem:[#allocation8 + $0x24] sm:$0xf]
    %v1681 = vld [vmem:[#allocation8 + $0x28] sm:$0xf]
    %v1682 = vld [vmem:[#allocation8 + $0x2c] sm:$0xf]
    %v1683 = vld [vmem:[#allocation8 + $0x30] sm:$0xf]
    %v1684 = vld [vmem:[#allocation8 + $0x34] sm:$0xf]
    %v1685 = vld [vmem:[#allocation8 + $0x38] sm:$0xf]
    %v1686 = vld [vmem:[#allocation8 + $0x3c] sm:$0xf]
    %v1687 = vld [vmem:[%s13] sm:$0x1]
    %v1689 = vlaneseq
    %v1690 = vshrl.u32 %v1689, 7
    %v1691 = vsub.s32 0, %v1690
    %v1692 = vrot.slane %v1687, %v1691
    %v1710 = vunpack.c.l.b16 %v1671
    %v1711 = vunpack.c.l.b16 %v1672
    %v1712 = vunpack.c.l.b16 %v1673
    %v1713 = vunpack.c.l.b16 %v1674
    %v1714 = vunpack.c.l.b16 %v1675
    %v1715 = vunpack.c.l.b16 %v1676
    %v1716 = vunpack.c.l.b16 %v1677
    %v1717 = vunpack.c.l.b16 %v1678
    %v1718 = vunpack.c.l.b16 %v1679
    %v1719 = vunpack.c.l.b16 %v1680
    %v1720 = vunpack.c.l.b16 %v1681
    %v1721 = vunpack.c.l.b16 %v1682
    %v1722 = vunpack.c.l.b16 %v1683
    %v1723 = vunpack.c.l.b16 %v1684
    %v1724 = vunpack.c.l.b16 %v1685
    %v1725 = vunpack.c.l.b16 %v1686
    %v1726 = vpack.c.b16 %v1711, %v1710
    %v1727 = vpack.c.b16 %v1713, %v1712
    %v1728 = vpack.c.b16 %v1715, %v1714
    %v1729 = vpack.c.b16 %v1717, %v1716
    %v1730 = vpack.c.b16 %v1719, %v1718
    %v1731 = vpack.c.b16 %v1721, %v1720
    %v1732 = vpack.c.b16 %v1723, %v1722
    %v1733 = vpack.c.b16 %v1725, %v1724
    %1742 = vmatprep.subr.bf16.mxu0 0
    %1743 = vmatpush1.bf16.msra.mxu0 %v1733
    %1744 = vmatprep.subr.bf16.mxu0 0
    %1745 = vmatpush1.bf16.msra.mxu0 %v1732
    %1746 = vmatprep.subr.bf16.mxu0 0
    %1747 = vmatpush1.bf16.msra.mxu0 %v1731
    %1748 = vmatprep.subr.bf16.mxu0 0
    %1749 = vmatpush1.bf16.msra.mxu0 %v1730
    %1750 = vmatprep.subr.bf16.mxu0 0
    %1751 = vmatpush1.bf16.msra.mxu0 %v1729
    %1752 = vmatprep.subr.bf16.mxu0 0
    %1753 = vmatpush1.bf16.msra.mxu0 %v1728
    %1754 = vmatprep.subr.bf16.mxu0 0
    %1755 = vmatpush1.bf16.msra.mxu0 %v1727
    %1756 = vmatprep.subr.bf16.mxu0 0
    %1757 = vmatpush1.bf16.msra.mxu0 %v1726
    %1758 = vmatprep.subr.bf16.mxu0 0
    %1759 = vmatpush2.bf16.msra.mxu0 0
    %1760 = vmatprep.subr.bf16.mxu0 0
    %1761 = vmatpush2.bf16.msra.mxu0 0
    %1762 = vmatprep.subr.bf16.mxu0 0
    %1763 = vmatpush2.bf16.msra.mxu0 0
    %1764 = vmatprep.subr.bf16.mxu0 0
    %1765 = vmatpush2.bf16.msra.mxu0 0
    %1766 = vmatprep.subr.bf16.mxu0 0
    %1767 = vmatpush2.bf16.msra.mxu0 0
    %1768 = vmatprep.subr.bf16.mxu0 0
    %1769 = vmatpush2.bf16.msra.mxu0 0
    %1770 = vmatprep.subr.bf16.mxu0 0
    %1771 = vmatpush2.bf16.msra.mxu0 0
    %1772 = vmatprep.subr.bf16.mxu0 0
    %1773 = vmatpush2.bf16.msra.mxu0 0
    %1774 = vmatprep.mubr.bf16.mxu0 0
    %1775 = vmatmul.mubr.bf16.gmra.mxu0 %v1667
    %v1776 = vpop.f32.mrf.mxu0
    %v1777 = vadd.f32 %v1692, %v1776
    %v1778 = vpop.f32.mrf.mxu0
    %v1779 = vpop.f32.mrf.mxu0
    %v1780 = vadd.f32 %v1692, %v1779
    %v1781 = vpop.f32.mrf.mxu0
    %1782 = vmatprep.mubr.bf16.mxu0 0
    %1783 = vmatmul.mubr.bf16.gmra.mxu0 %v1668
    %v1784 = vpop.f32.mrf.mxu0
    %v1785 = vadd.f32 %v1692, %v1784
    %v1786 = vpop.f32.mrf.mxu0
    %v1787 = vpop.f32.mrf.mxu0
    %v1788 = vadd.f32 %v1692, %v1787
    %v1789 = vpop.f32.mrf.mxu0
    %1790 = vmatprep.mubr.bf16.mxu0 0
    %1791 = vmatmul.mubr.bf16.gmra.mxu0 %v1669
    %v1792 = vpop.f32.mrf.mxu0
    %v1793 = vadd.f32 %v1692, %v1792
    %v1794 = vpop.f32.mrf.mxu0
    %v1795 = vpop.f32.mrf.mxu0
    %v1796 = vadd.f32 %v1692, %v1795
    %v1797 = vpop.f32.mrf.mxu0
    %1798 = vmatprep.mubr.bf16.mxu0 0
    %1799 = vmatmul.mubr.bf16.gmra.mxu0 %v1670
    %v1800 = vpop.f32.mrf.mxu0
    %v1801 = vadd.f32 %v1692, %v1800
    %v1802 = vpop.f32.mrf.mxu0
    %v1803 = vpop.f32.mrf.mxu0
    %v1804 = vadd.f32 %v1692, %v1803
    %v1805 = vpop.f32.mrf.mxu0
    %1806 = vdwg.mxu0
    %1807 = vst [vmem:[#allocation10] sm:$0xff] %v1777
    %1808 = vst [vmem:[#allocation10 + $0x8] sm:$0xff] %v1780
    %1809 = vst [vmem:[#allocation10 + $0x10] sm:$0xff] %v1785
    %1810 = vst [vmem:[#allocation10 + $0x18] sm:$0xff] %v1788
    %1811 = vst [vmem:[#allocation10 + $0x20] sm:$0xff] %v1793
    %1812 = vst [vmem:[#allocation10 + $0x28] sm:$0xff] %v1796
    %1813 = vst [vmem:[#allocation10 + $0x30] sm:$0xff] %v1801
    %1814 = vst [vmem:[#allocation10 + $0x38] sm:$0xff] %v1804
    // Predicated region
    $region74: #{tpu_custom_call.1} parent=1 // pred_check
      _
    $region75: #{tpu_custom_call.1} parent=1 // pred_check_branch
      %1816 = sbr.rel (0) target = $region77
    $region76: #{tpu_custom_call.1} parent=1 // pred_region
      %s1818 = ssub.s32 1024, 1024
      %1819 = vsyncadd [#allocation4], %s1818
      %s1820 = sshll.u32 [#allocation10], 4
      %s1821 = int_to_ptr.vmem [resolvable:$true] %s1820
      %1826 = dma.vmem_to_hbm [thread:$0]  %s1821, 1024, %s14, [#allocation4], 128, 128, 8
    $region77: #{tpu_custom_call.1} parent=1 // pred_fallthru
      _
    // Predicated region
    $region78: #{tpu_custom_call.1} parent=1 // pred_check
      _
    $region79: #{tpu_custom_call.1} parent=1 // pred_check_branch
      %1828 = sbr.rel (0) target = $region81
    $region80: #{tpu_custom_call.1} parent=1 // pred_region
      %1829 = dma.done [#allocation4], 1024
    $region81: #{tpu_custom_call.1} parent=1 // pred_fallthru
      _
    %1830 = vsyncpa [#allocation3], 1
    %1831 = vsyncpa [#allocation6], 1
    %1832 = vsyncpa [#allocation9], 1
    %1833 = vsyncpa [#allocation4], 1

</llo_original>
